<compile_context>
chip_gen: v7x
topology: tpu7x:2x2x1
jax: 0.10.0
libtpu: 0.0.40
codegen_flags: <defaults>
</compile_context>

<pallas_src>
import jax
import jax.numpy as jnp
from jax.experimental import pallas as pl
from jax.experimental.pallas import tpu as pltpu

KSIZE = 31
PAD = (KSIZE - 1) // 2  # 15


def _round_up(a, b):
    return (a + b - 1) // b * b


def _elu(x):
    # ELU(alpha=1). Clamp the exp argument so the untaken branch never
    # overflows (addresses the NaN-gradient concern); precision vs expm1
    # differs by < 1 ulp of 1.0, well inside the check tolerance.
    return jnp.where(x > 0.0, x, jnp.exp(jnp.minimum(x, 0.0)) - 1.0)


def _conv_toeplitz_T(cw, nx):
    """Banded Toeplitz matrix CT [nx, nx] such that y^T = CT @ d^T reproduces
    the 31-tap cross-correlation with replicate padding:
        y[b, i] = sum_k cw[k] * d[b, clip(i + k - PAD, 0, nx - 1)]
    """
    cw = cw.astype(jnp.float32)
    i = jnp.arange(nx)[:, None]            # output index   [nx, 1]
    j = jnp.arange(nx)[None, :]            # source index   [1, nx]
    k = j - i + PAD                        # tap index hitting (i, j), unclipped
    band = jnp.where((k >= 0) & (k < KSIZE),
                     cw[jnp.clip(k, 0, KSIZE - 1)], 0.0)          # [nx, nx]
    # Taps whose (unclipped) source falls off the left/right edge accumulate
    # onto the first / last source column (replicate padding).
    kk = jnp.arange(KSIZE)[None, :]        # [1, KSIZE]
    src = i + kk - PAD                     # [nx, KSIZE]
    left = jnp.sum(jnp.where(src < 0, cw[None, :], 0.0), axis=1)          # [nx]
    right = jnp.sum(jnp.where(src > nx - 1, cw[None, :], 0.0), axis=1)    # [nx]
    band = band.at[:, 0].add(left)
    band = band.at[:, nx - 1].add(right)
    return band


def shallow_ae_kernel(xT_ref, weT_ref, beT_ref, wdT_ref, bdT_ref,
                      cT_ref, cbT_ref, oT_ref):
    """Transposed layout: batch on lanes.
       xT [nx, TB], weT [L, nx], beT [L, 1], wdT [nx, L], bdT [nx, 1],
       cT [nx, nx], cbT [nx, 1], oT [nx, TB]."""
    hp = jax.lax.Precision.HIGHEST

    # encoder: h^T = elu(We^T @ x^T + be^T)         -> [L, TB]
    h = jnp.dot(weT_ref[...], xT_ref[...],
                preferred_element_type=jnp.float32, precision=hp)
    h = _elu(h + beT_ref[...])

    # decoder linear: d^T = elu(Wd^T @ h^T + bd^T)  -> [nx, TB]
    d = jnp.dot(wdT_ref[...], h,
                preferred_element_type=jnp.float32, precision=hp)
    d = _elu(d + bdT_ref[...])

    # replicate-padded 31-tap conv as a banded Toeplitz matmul on the MXU
    oT_ref[...] = jnp.dot(cT_ref[...], d,
                          preferred_element_type=jnp.float32,
                          precision=hp) + cbT_ref[...]


def shallow_autoencoder_forward(x_nchw, params, *, tb=None):
    we, be, wd, bd, cw, cb = params
    B = x_nchw.shape[0]
    nx = x_nchw.shape[2]
    L = we.shape[1]

    x2d = x_nchw[:, 0, :, 0].astype(jnp.float32)          # [B, nx]
    xT = x2d.T                                            # [nx, B]  (batch -> lanes)

    # Transposed / folded parameters (built once in the wrapper).
    weT = we.T.astype(jnp.float32)                        # [L, nx]
    beT = be.T.astype(jnp.float32)                        # [L, 1]
    wdT = wd.T.astype(jnp.float32)                        # [nx, L]
    bdT = bd.T.astype(jnp.float32)                        # [nx, 1]
    cT = _conv_toeplitz_T(cw, nx)                         # [nx, nx]
    cbT = jnp.full((nx, 1), cb[0], dtype=jnp.float32)     # [nx, 1]

    # Batch (lane) tile: biggest block that keeps the working set modest.
    # For very large nx, pass a smaller tb explicitly.
    if tb is None:
        tb = B if B <= 1024 else 1024
    B_pad = _round_up(B, tb)
    if B_pad != B:
        xT = jnp.pad(xT, ((0, 0), (0, B_pad - B)))

    grid = (B_pad // tb,)

    outT = pl.pallas_call(
        shallow_ae_kernel,
        out_shape=jax.ShapeDtypeStruct((nx, B_pad), jnp.float32),
        grid=grid,
        in_specs=[
            pl.BlockSpec((nx, tb), lambda i: (0, i)),     # xT   : per-step block
            pl.BlockSpec((L, nx), lambda i: (0, 0)),      # We^T : resident
            pl.BlockSpec((L, 1), lambda i: (0, 0)),       # be^T : resident
            pl.BlockSpec((nx, L), lambda i: (0, 0)),      # Wd^T : resident
            pl.BlockSpec((nx, 1), lambda i: (0, 0)),      # bd^T : resident
            pl.BlockSpec((nx, nx), lambda i: (0, 0)),     # C^T  : resident
            pl.BlockSpec((nx, 1), lambda i: (0, 0)),      # cb   : resident
        ],
        out_specs=pl.BlockSpec((nx, tb), lambda i: (0, i)),
        compiler_params=pltpu.CompilerParams(
            dimension_semantics=("parallel",),            # 2 TCs on v7x
            vmem_limit_bytes=64 * 1024 * 1024,
        ),
    )(xT, weT, beT, wdT, bdT, cT, cbT)

    out2d = outT[:, :B].T                                 # [B, nx]
    return out2d[:, None, :, None]                        # NCHW [B, 1, nx, 1]


def init_params(key, nx, num_latent_states):
    ks = jax.random.split(key, 6)
    # nn.Linear(nx, latent): U(-1/sqrt(in), 1/sqrt(in)); stored as [in, out]
    be_bound = 1.0 / jnp.sqrt(nx)
    we = jax.random.uniform(ks[0], (nx, num_latent_states), jnp.float32,
                            -be_bound, be_bound)
    be = jax.random.uniform(ks[1], (1, num_latent_states), jnp.float32,
                            -be_bound, be_bound)
    # nn.Linear(latent, nx)
    bd_bound = 1.0 / jnp.sqrt(num_latent_states)
    wd = jax.random.uniform(ks[2], (num_latent_states, nx), jnp.float32,
                            -bd_bound, bd_bound)
    bd = jax.random.uniform(ks[3], (1, nx), jnp.float32, -bd_bound, bd_bound)
    # nn.Conv2d(1, 1, (31, 1)): fan_in = 1*31*1
    cb_bound = 1.0 / jnp.sqrt(float(KSIZE))
    cw = jax.random.uniform(ks[4], (KSIZE,), jnp.float32, -cb_bound, cb_bound)
    cb = jax.random.uniform(ks[5], (1,), jnp.float32, -cb_bound, cb_bound)
    return we, be, wd, bd, cw, cb


def reference_forward(x_nchw, params):
    """Pure-JAX reference matching the PyTorch forward (full f32 matmuls)."""
    we, be, wd, bd, cw, cb = params
    nx = x_nchw.shape[2]
    hp = jax.lax.Precision.HIGHEST
    x2d = x_nchw[:, 0, :, 0].astype(jnp.float32)
    h = jax.nn.elu(jnp.dot(x2d, we, precision=hp) + be)
    d = jax.nn.elu(jnp.dot(h, wd, precision=hp) + bd)
    xp = jnp.pad(d, ((0, 0), (PAD, PAD)), mode="edge")
    y = cb[0] * jnp.ones_like(d)
    for k in range(KSIZE):
        y = y + cw[k] * xp[:, k:k + nx]
    return y[:, None, :, None]


if __name__ == "__main__":
    # shapes consistent with the module: nchan=1 (required by the conv),
    # nx=16, num_latent_states=8
    nchan, nx, num_latent_states = 1, 16, 8

    key = jax.random.PRNGKey(0)
    kx, kp = jax.random.split(key)
    params = init_params(kp, nx, num_latent_states)

    # --- test 1: tiny batch, single grid step (default tiling) ---
    B1 = 2
    x1 = jax.random.normal(kx, (B1, nchan, nx, 1), dtype=jnp.float32)
    fwd1 = jax.jit(lambda x: shallow_autoencoder_forward(x, params))
    out1 = jax.block_until_ready(fwd1(x1))
    ref1 = reference_forward(x1, params)
    assert out1.shape == (B1, 1, nx, 1)
    assert jnp.allclose(out1, ref1, rtol=1e-5, atol=1e-5), (
        f"max abs err (small) = {jnp.max(jnp.abs(out1 - ref1))}")

    # --- test 2: multi-step grid with lane-dense (128-wide) batch tiles ---
    B2 = 256
    x2 = jax.random.normal(jax.random.fold_in(kx, 1),
                           (B2, nchan, nx, 1), dtype=jnp.float32)
    fwd2 = jax.jit(lambda x: shallow_autoencoder_forward(x, params, tb=128))
    out2 = jax.block_until_ready(fwd2(x2))
    ref2 = reference_forward(x2, params)
    assert out2.shape == (B2, 1, nx, 1)
    assert jnp.allclose(out2, ref2, rtol=1e-5, atol=1e-5), (
        f"max abs err (tiled) = {jnp.max(jnp.abs(out2 - ref2))}")

    print("KERNEL_OK")
</pallas_src>

<mosaic_0001>
module attributes {stable_mosaic.version = 11 : i64} {
  func.func @shallow_ae_kernel(%arg0: i32, %arg1: memref<16x2xf32, #tpu.memory_space<vmem>>, %arg2: memref<8x16xf32, #tpu.memory_space<vmem>>, %arg3: memref<8x1xf32, #tpu.memory_space<vmem>>, %arg4: memref<16x8xf32, #tpu.memory_space<vmem>>, %arg5: memref<16x1xf32, #tpu.memory_space<vmem>>, %arg6: memref<16x16xf32, #tpu.memory_space<vmem>>, %arg7: memref<16x1xf32, #tpu.memory_space<vmem>>, %arg8: memref<16x2xf32, #tpu.memory_space<vmem>>) attributes {dimension_semantics = [#tpu.dimension_semantics<parallel>], iteration_bounds = array<i64: 1>, scalar_prefetch = 0 : i64, scratch_operands = 0 : i64, tpu.core_type = #tpu.core_type<tc>, window_params = [{transform_indices = @transform_0, window_bounds = array<i64: 16, 2>}, {pipeline_mode = #tpu.pipeline_mode<synchronous>, transform_indices = @transform_1, window_bounds = array<i64: 8, 16>}, {pipeline_mode = #tpu.pipeline_mode<synchronous>, transform_indices = @transform_2, window_bounds = array<i64: 8, 1>}, {pipeline_mode = #tpu.pipeline_mode<synchronous>, transform_indices = @transform_3, window_bounds = array<i64: 16, 8>}, {pipeline_mode = #tpu.pipeline_mode<synchronous>, transform_indices = @transform_4, window_bounds = array<i64: 16, 1>}, {pipeline_mode = #tpu.pipeline_mode<synchronous>, transform_indices = @transform_5, window_bounds = array<i64: 16, 16>}, {pipeline_mode = #tpu.pipeline_mode<synchronous>, transform_indices = @transform_6, window_bounds = array<i64: 16, 1>}, {transform_indices = @transform_7, window_bounds = array<i64: 16, 2>}]} {
    %c0 = arith.constant 0 : index
    %c0_0 = arith.constant 0 : index
    %0 = vector.load %arg2[%c0, %c0_0] : memref<8x16xf32, #tpu.memory_space<vmem>>, vector<8x16xf32>
    %c0_1 = arith.constant 0 : index
    %c0_2 = arith.constant 0 : index
    %1 = vector.load %arg1[%c0_1, %c0_2] : memref<16x2xf32, #tpu.memory_space<vmem>>, vector<16x2xf32>
    %cst = arith.constant dense<0.000000e+00> : vector<8x2xf32>
    %2 = tpu.matmul %0, %1, %cst {dimension_numbers = #tpu.dot_dimension_numbers<[1], [0], [0], [1], [0, 0, 1, 1], [], []>, precision = #tpu.contract_precision<fp32>} : vector<8x16xf32>, vector<16x2xf32>, vector<8x2xf32> -> vector<8x2xf32>
    %c0_3 = arith.constant 0 : index
    %c0_4 = arith.constant 0 : index
    %3 = vector.load %arg3[%c0_3, %c0_4] : memref<8x1xf32, #tpu.memory_space<vmem>>, vector<8x1xf32>
    %4 = vector.broadcast %3 : vector<8x1xf32> to vector<8x2xf32>
    %5 = arith.addf %2, %4 : vector<8x2xf32>
    %cst_5 = arith.constant 0.000000e+00 : f32
    %6 = vector.broadcast %cst_5 : f32 to vector<8x2xf32>
    %7 = arith.cmpf ogt, %5, %6 : vector<8x2xf32>
    %cst_6 = arith.constant 0.000000e+00 : f32
    %8 = vector.broadcast %cst_6 : f32 to vector<8x2xf32>
    %9 = arith.minimumf %5, %8 : vector<8x2xf32>
    %10 = math.exp %9 : vector<8x2xf32>
    %cst_7 = arith.constant 1.000000e+00 : f32
    %11 = vector.broadcast %cst_7 : f32 to vector<8x2xf32>
    %12 = arith.subf %10, %11 : vector<8x2xf32>
    %13 = arith.select %7, %5, %12 : vector<8x2xi1>, vector<8x2xf32>
    %c0_8 = arith.constant 0 : index
    %c0_9 = arith.constant 0 : index
    %14 = vector.load %arg4[%c0_8, %c0_9] : memref<16x8xf32, #tpu.memory_space<vmem>>, vector<16x8xf32>
    %cst_10 = arith.constant dense<0.000000e+00> : vector<16x2xf32>
    %15 = tpu.matmul %14, %13, %cst_10 {dimension_numbers = #tpu.dot_dimension_numbers<[1], [0], [0], [1], [0, 0, 1, 1], [], []>, precision = #tpu.contract_precision<fp32>} : vector<16x8xf32>, vector<8x2xf32>, vector<16x2xf32> -> vector<16x2xf32>
    %c0_11 = arith.constant 0 : index
    %c0_12 = arith.constant 0 : index
    %16 = vector.load %arg5[%c0_11, %c0_12] : memref<16x1xf32, #tpu.memory_space<vmem>>, vector<16x1xf32>
    %17 = vector.broadcast %16 : vector<16x1xf32> to vector<16x2xf32>
    %18 = arith.addf %15, %17 : vector<16x2xf32>
    %cst_13 = arith.constant 0.000000e+00 : f32
    %19 = vector.broadcast %cst_13 : f32 to vector<16x2xf32>
    %20 = arith.cmpf ogt, %18, %19 : vector<16x2xf32>
    %cst_14 = arith.constant 0.000000e+00 : f32
    %21 = vector.broadcast %cst_14 : f32 to vector<16x2xf32>
    %22 = arith.minimumf %18, %21 : vector<16x2xf32>
    %23 = math.exp %22 : vector<16x2xf32>
    %cst_15 = arith.constant 1.000000e+00 : f32
    %24 = vector.broadcast %cst_15 : f32 to vector<16x2xf32>
    %25 = arith.subf %23, %24 : vector<16x2xf32>
    %26 = arith.select %20, %18, %25 : vector<16x2xi1>, vector<16x2xf32>
    %c0_16 = arith.constant 0 : index
    %c0_17 = arith.constant 0 : index
    %27 = vector.load %arg6[%c0_16, %c0_17] : memref<16x16xf32, #tpu.memory_space<vmem>>, vector<16x16xf32>
    %cst_18 = arith.constant dense<0.000000e+00> : vector<16x2xf32>
    %28 = tpu.matmul %27, %26, %cst_18 {dimension_numbers = #tpu.dot_dimension_numbers<[1], [0], [0], [1], [0, 0, 1, 1], [], []>, precision = #tpu.contract_precision<fp32>} : vector<16x16xf32>, vector<16x2xf32>, vector<16x2xf32> -> vector<16x2xf32>
    %c0_19 = arith.constant 0 : index
    %c0_20 = arith.constant 0 : index
    %29 = vector.load %arg7[%c0_19, %c0_20] : memref<16x1xf32, #tpu.memory_space<vmem>>, vector<16x1xf32>
    %30 = vector.broadcast %29 : vector<16x1xf32> to vector<16x2xf32>
    %31 = arith.addf %28, %30 : vector<16x2xf32>
    %c0_21 = arith.constant 0 : index
    %c0_22 = arith.constant 0 : index
    %32 = vector.load %arg8[%c0_21, %c0_22] : memref<16x2xf32, #tpu.memory_space<vmem>>, vector<16x2xf32>
    tpu.vector_store %arg8[%c0_21, %c0_22], %31 {strides = array<i32>} : memref<16x2xf32, #tpu.memory_space<vmem>>, vector<16x2xf32>,
    return
  }
  func.func @transform_0(%arg0: i32) -> (i32, i32) {
    %c0_i32 = arith.constant 0 : i32
    %c0_i32_0 = arith.constant 0 : i32
    return %c0_i32, %arg0 : i32, i32
  }
  func.func @transform_1(%arg0: i32) -> (i32, i32) {
    %c0_i32 = arith.constant 0 : i32
    %c0_i32_0 = arith.constant 0 : i32
    %c0_i32_1 = arith.constant 0 : i32
    return %c0_i32, %c0_i32_0 : i32, i32
  }
  func.func @transform_2(%arg0: i32) -> (i32, i32) {
    %c0_i32 = arith.constant 0 : i32
    %c0_i32_0 = arith.constant 0 : i32
    %c0_i32_1 = arith.constant 0 : i32
    return %c0_i32, %c0_i32_0 : i32, i32
  }
  func.func @transform_3(%arg0: i32) -> (i32, i32) {
    %c0_i32 = arith.constant 0 : i32
    %c0_i32_0 = arith.constant 0 : i32
    %c0_i32_1 = arith.constant 0 : i32
    return %c0_i32, %c0_i32_0 : i32, i32
  }
  func.func @transform_4(%arg0: i32) -> (i32, i32) {
    %c0_i32 = arith.constant 0 : i32
    %c0_i32_0 = arith.constant 0 : i32
    %c0_i32_1 = arith.constant 0 : i32
    return %c0_i32, %c0_i32_0 : i32, i32
  }
  func.func @transform_5(%arg0: i32) -> (i32, i32) {
    %c0_i32 = arith.constant 0 : i32
    %c0_i32_0 = arith.constant 0 : i32
    %c0_i32_1 = arith.constant 0 : i32
    return %c0_i32, %c0_i32_0 : i32, i32
  }
  func.func @transform_6(%arg0: i32) -> (i32, i32) {
    %c0_i32 = arith.constant 0 : i32
    %c0_i32_0 = arith.constant 0 : i32
    %c0_i32_1 = arith.constant 0 : i32
    return %c0_i32, %c0_i32_0 : i32, i32
  }
  func.func @transform_7(%arg0: i32) -> (i32, i32) {
    %c0_i32 = arith.constant 0 : i32
    %c0_i32_0 = arith.constant 0 : i32
    return %c0_i32, %arg0 : i32, i32
  }
}

</mosaic_0001>

<llo_original>
// kernel: _lambda_.1
$region0: #{_lambda_.1}
  #allocation0 [shape = 'u32[]', space=smem, size = 0x4, offset = 0x4, fixed_abs, tag = 'smem constant byte address 0x4 - core index']
  #allocation1 [shape = 'u32[144,128]{1,0:T(1,128)}', space=vmem, size = 0x12000, scoped, tag = 'internal scratch']
  %s0 = inlined_call_operand.hbm [shape: f32[16,2], index: 0, kind: input, shape index: {}]
  %s1 = inlined_call_operand.hbm [shape: f32[8,16], index: 1, kind: input, shape index: {}]
  %s2 = inlined_call_operand.hbm [shape: f32[8,1], index: 2, kind: input, shape index: {}]
  %s3 = inlined_call_operand.hbm [shape: f32[16,8], index: 3, kind: input, shape index: {}]
  %s4 = inlined_call_operand.hbm [shape: f32[16,1], index: 4, kind: input, shape index: {}]
  %s5 = inlined_call_operand.hbm [shape: f32[16,16], index: 5, kind: input, shape index: {}]
  %s6 = inlined_call_operand.hbm [shape: f32[16,1], index: 6, kind: input, shape index: {}]
  %s7 = inlined_call_operand.hbm [shape: f32[16,2], index: 7, kind: output, shape index: {}]
  %s8 = sld [smem:[#allocation0]]
  $region66: #{_lambda_.1} parent=0
    _
  %s10 = ssub.s32 1, %s8
  %s11 = scalar_select 0, %s10, %s8
  $region1: #{_lambda_.1} parent=0
    #allocation2 [shape = 'u8[8192]{0}', space=vmem, size = 0x2000, scoped, tag = 'input window, operand 0, single buffered']
    #allocation3 [shape = 's32[1]{0}', space=sflag, size = 0x4, scoped, tag = 'scoped memory for _lambda_.1']
    #allocation4 [shape = 's32[1]{0}', space=sflag, size = 0x4, scoped, tag = 'scoped memory for _lambda_.1']
    #allocation5 [shape = 'u8[4096]{0}', space=vmem, size = 0x1000, scoped, tag = 'input window, operand 1, single buffered']
    #allocation6 [shape = 's32[1]{0}', space=sflag, size = 0x4, scoped, tag = 'scoped memory for _lambda_.1']
    #allocation7 [shape = 'u8[4096]{0}', space=vmem, size = 0x1000, scoped, tag = 'input window, operand 2, single buffered']
    #allocation8 [shape = 'u8[8192]{0}', space=vmem, size = 0x2000, scoped, tag = 'input window, operand 3, single buffered']
    #allocation9 [shape = 's32[1]{0}', space=sflag, size = 0x4, scoped, tag = 'scoped memory for _lambda_.1']
    #allocation10 [shape = 'u8[8192]{0}', space=vmem, size = 0x2000, scoped, tag = 'input window, operand 4, single buffered']
    #allocation11 [shape = 'u8[8192]{0}', space=vmem, size = 0x2000, scoped, tag = 'input window, operand 5, single buffered']
    #allocation12 [shape = 's32[1]{0}', space=sflag, size = 0x4, scoped, tag = 'scoped memory for _lambda_.1']
    #allocation13 [shape = 'u8[8192]{0}', space=vmem, size = 0x2000, scoped, tag = 'input window, operand 6, single buffered']
    #allocation14 [shape = 'u8[8192]{0}', space=vmem, size = 0x2000, scoped, tag = 'output window, operand 0, single buffered']
    %12 = vsyncpa [#allocation3], 0
    %13 = vsyncpa [#allocation6], 0
    %14 = vsyncpa [#allocation9], 0
    %15 = vsyncpa [#allocation12], 0
    %16 = vsyncpa [#allocation4], 0
    // Predicated region
    $region2: #{_lambda_.1} parent=1 // pred_check
      _
    $region3: #{_lambda_.1} parent=1 // pred_check_branch
      %18 = sbr.rel (0) target = $region5
    $region4: #{_lambda_.1} parent=1 // pred_region
      %s20 = ssub.s32 256, 256
      %21 = vsyncadd [#allocation3], %s20
      %s22 = sshll.u32 [#allocation2], 4
      %s23 = int_to_ptr.vmem [resolvable:$true] %s22
      %28 = dma.hbm_to_vmem [thread:$0]  %s0, 256, %s23, [#allocation3], 128, 128, 8
    $region5: #{_lambda_.1} parent=1 // pred_fallthru
      _
    // Predicated region
    $region6: #{_lambda_.1} parent=1 // pred_check
      _
    $region7: #{_lambda_.1} parent=1 // pred_check_branch
      %30 = sbr.rel (0) target = $region9
    $region8: #{_lambda_.1} parent=1 // pred_region
      %s32 = ssub.s32 128, 128
      %33 = vsyncadd [#allocation6], %s32
      %s35 = sshll.u32 [#allocation5], 4
      %s36 = int_to_ptr.vmem [resolvable:$true] %s35
      %38 = dma.hbm_to_vmem [thread:$0]  %s1, 128, %s36, [#allocation6]
    $region9: #{_lambda_.1} parent=1 // pred_fallthru
      _
    // Predicated region
    $region10: #{_lambda_.1} parent=1 // pred_check
      _
    $region11: #{_lambda_.1} parent=1 // pred_check_branch
      %40 = sbr.rel (0) target = $region13
    $region12: #{_lambda_.1} parent=1 // pred_region
      %s42 = ssub.s32 128, 128
      %43 = vsyncadd [#allocation6], %s42
      %s45 = sshll.u32 [#allocation7], 4
      %s46 = int_to_ptr.vmem [resolvable:$true] %s45
      %48 = dma.hbm_to_vmem [thread:$0]  %s2, 128, %s46, [#allocation6]
    $region13: #{_lambda_.1} parent=1 // pred_fallthru
      _
    // Predicated region
    $region14: #{_lambda_.1} parent=1 // pred_check
      _
    $region15: #{_lambda_.1} parent=1 // pred_check_branch
      %50 = sbr.rel (0) target = $region17
    $region16: #{_lambda_.1} parent=1 // pred_region
      %s52 = ssub.s32 256, 256
      %53 = vsyncadd [#allocation9], %s52
      %s54 = sshll.u32 [#allocation8], 4
      %s55 = int_to_ptr.vmem [resolvable:$true] %s54
      %60 = dma.hbm_to_vmem [thread:$0]  %s3, 256, %s55, [#allocation9], 128, 128, 8
    $region17: #{_lambda_.1} parent=1 // pred_fallthru
      _
    // Predicated region
    $region18: #{_lambda_.1} parent=1 // pred_check
      _
    $region19: #{_lambda_.1} parent=1 // pred_check_branch
      %62 = sbr.rel (0) target = $region21
    $region20: #{_lambda_.1} parent=1 // pred_region
      %s64 = ssub.s32 256, 256
      %65 = vsyncadd [#allocation9], %s64
      %s66 = sshll.u32 [#allocation10], 4
      %s67 = int_to_ptr.vmem [resolvable:$true] %s66
      %72 = dma.hbm_to_vmem [thread:$0]  %s4, 256, %s67, [#allocation9], 128, 128, 8
    $region21: #{_lambda_.1} parent=1 // pred_fallthru
      _
    // Predicated region
    $region22: #{_lambda_.1} parent=1 // pred_check
      _
    $region23: #{_lambda_.1} parent=1 // pred_check_branch
      %74 = sbr.rel (0) target = $region25
    $region24: #{_lambda_.1} parent=1 // pred_region
      %s76 = ssub.s32 256, 256
      %77 = vsyncadd [#allocation12], %s76
      %s78 = sshll.u32 [#allocation11], 4
      %s79 = int_to_ptr.vmem [resolvable:$true] %s78
      %84 = dma.hbm_to_vmem [thread:$0]  %s5, 256, %s79, [#allocation12], 128, 128, 8
    $region25: #{_lambda_.1} parent=1 // pred_fallthru
      _
    // Predicated region
    $region26: #{_lambda_.1} parent=1 // pred_check
      _
    $region27: #{_lambda_.1} parent=1 // pred_check_branch
      %86 = sbr.rel (0) target = $region29
    $region28: #{_lambda_.1} parent=1 // pred_region
      %s88 = ssub.s32 256, 256
      %89 = vsyncadd [#allocation12], %s88
      %s90 = sshll.u32 [#allocation13], 4
      %s91 = int_to_ptr.vmem [resolvable:$true] %s90
      %96 = dma.hbm_to_vmem [thread:$0]  %s6, 256, %s91, [#allocation12], 128, 128, 8
    $region29: #{_lambda_.1} parent=1 // pred_fallthru
      _
    // Predicated region
    $region30: #{_lambda_.1} parent=1 // pred_check
      _
    $region31: #{_lambda_.1} parent=1 // pred_check_branch
      %98 = sbr.rel (0) target = $region33
    $region32: #{_lambda_.1} parent=1 // pred_region
      %99 = dma.done [#allocation3], 256
    $region33: #{_lambda_.1} parent=1 // pred_fallthru
      _
    // Predicated region
    $region34: #{_lambda_.1} parent=1 // pred_check
      _
    $region35: #{_lambda_.1} parent=1 // pred_check_branch
      %101 = sbr.rel (0) target = $region37
    $region36: #{_lambda_.1} parent=1 // pred_region
      %102 = dma.done [#allocation6], 128
    $region37: #{_lambda_.1} parent=1 // pred_fallthru
      _
    // Predicated region
    $region38: #{_lambda_.1} parent=1 // pred_check
      _
    $region39: #{_lambda_.1} parent=1 // pred_check_branch
      %104 = sbr.rel (0) target = $region41
    $region40: #{_lambda_.1} parent=1 // pred_region
      %105 = dma.done [#allocation6], 128
    $region41: #{_lambda_.1} parent=1 // pred_fallthru
      _
    // Predicated region
    $region42: #{_lambda_.1} parent=1 // pred_check
      _
    $region43: #{_lambda_.1} parent=1 // pred_check_branch
      %107 = sbr.rel (0) target = $region45
    $region44: #{_lambda_.1} parent=1 // pred_region
      %108 = dma.done [#allocation9], 256
    $region45: #{_lambda_.1} parent=1 // pred_fallthru
      _
    // Predicated region
    $region46: #{_lambda_.1} parent=1 // pred_check
      _
    $region47: #{_lambda_.1} parent=1 // pred_check_branch
      %110 = sbr.rel (0) target = $region49
    $region48: #{_lambda_.1} parent=1 // pred_region
      %111 = dma.done [#allocation9], 256
    $region49: #{_lambda_.1} parent=1 // pred_fallthru
      _
    // Predicated region
    $region50: #{_lambda_.1} parent=1 // pred_check
      _
    $region51: #{_lambda_.1} parent=1 // pred_check_branch
      %113 = sbr.rel (0) target = $region53
    $region52: #{_lambda_.1} parent=1 // pred_region
      %114 = dma.done [#allocation12], 256
    $region53: #{_lambda_.1} parent=1 // pred_fallthru
      _
    // Predicated region
    $region54: #{_lambda_.1} parent=1 // pred_check
      _
    $region55: #{_lambda_.1} parent=1 // pred_check_branch
      %116 = sbr.rel (0) target = $region57
    $region56: #{_lambda_.1} parent=1 // pred_region
      %117 = dma.done [#allocation12], 256
    $region57: #{_lambda_.1} parent=1 // pred_fallthru
      _
    %v118 = vld [vmem:[#allocation5] sm:$0xff]
    %v119 = vld [vmem:[#allocation2] sm:$0xff]
    %v120 = vld [vmem:[#allocation2 + $0x8] sm:$0xff]
    %v121 = vld [vmem:[#allocation7] sm:$0xff]
    %123 = vset.pattern.permute.xlu0 0
    %124 = vperm.xlu0 %123, %v121
    %v125 = vpop.permute.xlu0 %124
    %vm127 = vcmask 130048
    %v129 = vsel %vm127, %v118, 0
    %131 = vmatprep.subr.mxu0 0.0
    %v132 = vand.u32 %v119, 4294901760
    %133 = vmatpush1.msra.mxu0 %v132
    %134 = vmatprep.subr.mxu0 0.0
    %v135 = vand.u32 %v120, 4294901760
    %136 = vmatpush1.msra.mxu0 %v135
    %137 = vmatprep.subr.mxu0 0.0
    %138 = vmatpush1.msra.mxu0 0.0
    %139 = vmatprep.subr.mxu0 0.0
    %140 = vmatpush1.msra.mxu0 0.0
    %141 = vmatprep.subr.mxu0 0.0
    %142 = vmatpush1.msra.mxu0 0.0
    %143 = vmatprep.subr.mxu0 0.0
    %144 = vmatpush1.msra.mxu0 0.0
    %145 = vmatprep.subr.mxu0 0.0
    %146 = vmatpush1.msra.mxu0 0.0
    %147 = vmatprep.subr.mxu0 0.0
    %148 = vmatpush1.msra.mxu0 0.0
    %149 = vmatprep.subr.mxu0 0.0
    %150 = vmatpush1.msra.mxu0 0.0
    %151 = vmatprep.subr.mxu0 0.0
    %152 = vmatpush1.msra.mxu0 0.0
    %153 = vmatprep.subr.mxu0 0.0
    %154 = vmatpush1.msra.mxu0 0.0
    %155 = vmatprep.subr.mxu0 0.0
    %156 = vmatpush1.msra.mxu0 0.0
    %157 = vmatprep.subr.mxu0 0.0
    %158 = vmatpush1.msra.mxu0 0.0
    %159 = vmatprep.subr.mxu0 0.0
    %160 = vmatpush1.msra.mxu0 0.0
    %161 = vmatprep.subr.mxu0 0.0
    %162 = vmatpush1.msra.mxu0 0.0
    %163 = vmatprep.subr.mxu0 0.0
    %164 = vmatpush1.msra.mxu0 0.0
    %165 = vmatprep.subr.mxu0 0.0
    %166 = vmatpush1.msra.mxu0 0.0
    %167 = vmatprep.subr.mxu0 0.0
    %168 = vmatpush1.msra.mxu0 0.0
    %169 = vmatprep.subr.mxu0 0.0
    %170 = vmatpush1.msra.mxu0 0.0
    %171 = vmatprep.subr.mxu0 0.0
    %172 = vmatpush1.msra.mxu0 0.0
    %173 = vmatprep.subr.mxu0 0.0
    %174 = vmatpush1.msra.mxu0 0.0
    %175 = vmatprep.subr.mxu0 0.0
    %176 = vmatpush1.msra.mxu0 0.0
    %177 = vmatprep.subr.mxu0 0.0
    %178 = vmatpush1.msra.mxu0 0.0
    %179 = vmatprep.subr.mxu0 0.0
    %180 = vmatpush1.msra.mxu0 0.0
    %181 = vmatprep.subr.mxu0 0.0
    %182 = vmatpush1.msra.mxu0 0.0
    %183 = vmatprep.subr.mxu0 0.0
    %184 = vmatpush1.msra.mxu0 0.0
    %185 = vmatprep.subr.mxu0 0.0
    %186 = vmatpush1.msra.mxu0 0.0
    %187 = vmatprep.subr.mxu0 0.0
    %188 = vmatpush1.msra.mxu0 0.0
    %189 = vmatprep.subr.mxu0 0.0
    %190 = vmatpush1.msra.mxu0 0.0
    %191 = vmatprep.subr.mxu0 0.0
    %192 = vmatpush1.msra.mxu0 0.0
    %193 = vmatprep.subr.mxu0 0.0
    %194 = vmatpush1.msra.mxu0 0.0
    %195 = vmatprep.subr.mxu0 0.0
    %196 = vmatpush1.msra.mxu0 0.0
    %197 = vmatprep.mubr.f32.mxu0 0.0
    %v198 = vand.u32 %v129, 4294901760
    %v199 = vsub.f32 %v129, %v198
    %v200 = vand.u32 %v199, 4294901760
    %v201 = vsub.f32 %v199, %v200
    %v202 = vand.u32 %v201, 4294901760
    %203 = vmatmul.mubr.f32.gmra.mrb[0].mxu0 %v202
    %v204 = vpop.f32.mrb[0].mxu0
    %v205 = vadd.f32 %v125, %v204
    %v206 = vpop.f32.mrb[0].mxu0
    %207 = vdwg.mxu0
    %208 = vmatprep.subr.mxu0 0.0
    %v209 = vand.u32 %v119, 4294901760
    %v210 = vsub.f32 %v119, %v209
    %v211 = vand.u32 %v210, 4294901760
    %v212 = vsub.f32 %v210, %v211
    %v213 = vand.u32 %v212, 4294901760
    %214 = vmatpush1.msra.mxu0 %v213
    %215 = vmatprep.subr.mxu0 0.0
    %v216 = vand.u32 %v120, 4294901760
    %v217 = vsub.f32 %v120, %v216
    %v218 = vand.u32 %v217, 4294901760
    %v219 = vsub.f32 %v217, %v218
    %v220 = vand.u32 %v219, 4294901760
    %221 = vmatpush1.msra.mxu0 %v220
    %222 = vmatprep.subr.mxu0 0.0
    %223 = vmatpush1.msra.mxu0 0.0
    %224 = vmatprep.subr.mxu0 0.0
    %225 = vmatpush1.msra.mxu0 0.0
    %226 = vmatprep.subr.mxu0 0.0
    %227 = vmatpush1.msra.mxu0 0.0
    %228 = vmatprep.subr.mxu0 0.0
    %229 = vmatpush1.msra.mxu0 0.0
    %230 = vmatprep.subr.mxu0 0.0
    %231 = vmatpush1.msra.mxu0 0.0
    %232 = vmatprep.subr.mxu0 0.0
    %233 = vmatpush1.msra.mxu0 0.0
    %234 = vmatprep.subr.mxu0 0.0
    %235 = vmatpush1.msra.mxu0 0.0
    %236 = vmatprep.subr.mxu0 0.0
    %237 = vmatpush1.msra.mxu0 0.0
    %238 = vmatprep.subr.mxu0 0.0
    %239 = vmatpush1.msra.mxu0 0.0
    %240 = vmatprep.subr.mxu0 0.0
    %241 = vmatpush1.msra.mxu0 0.0
    %242 = vmatprep.subr.mxu0 0.0
    %243 = vmatpush1.msra.mxu0 0.0
    %244 = vmatprep.subr.mxu0 0.0
    %245 = vmatpush1.msra.mxu0 0.0
    %246 = vmatprep.subr.mxu0 0.0
    %247 = vmatpush1.msra.mxu0 0.0
    %248 = vmatprep.subr.mxu0 0.0
    %249 = vmatpush1.msra.mxu0 0.0
    %250 = vmatprep.subr.mxu0 0.0
    %251 = vmatpush1.msra.mxu0 0.0
    %252 = vmatprep.subr.mxu0 0.0
    %253 = vmatpush1.msra.mxu0 0.0
    %254 = vmatprep.subr.mxu0 0.0
    %255 = vmatpush1.msra.mxu0 0.0
    %256 = vmatprep.subr.mxu0 0.0
    %257 = vmatpush1.msra.mxu0 0.0
    %258 = vmatprep.subr.mxu0 0.0
    %259 = vmatpush1.msra.mxu0 0.0
    %260 = vmatprep.subr.mxu0 0.0
    %261 = vmatpush1.msra.mxu0 0.0
    %262 = vmatprep.subr.mxu0 0.0
    %263 = vmatpush1.msra.mxu0 0.0
    %264 = vmatprep.subr.mxu0 0.0
    %265 = vmatpush1.msra.mxu0 0.0
    %266 = vmatprep.subr.mxu0 0.0
    %267 = vmatpush1.msra.mxu0 0.0
    %268 = vmatprep.subr.mxu0 0.0
    %269 = vmatpush1.msra.mxu0 0.0
    %270 = vmatprep.subr.mxu0 0.0
    %271 = vmatpush1.msra.mxu0 0.0
    %272 = vmatprep.subr.mxu0 0.0
    %273 = vmatpush1.msra.mxu0 0.0
    %274 = vmatprep.subr.mxu0 0.0
    %275 = vmatpush1.msra.mxu0 0.0
    %276 = vmatprep.subr.mxu0 0.0
    %277 = vmatpush1.msra.mxu0 0.0
    %278 = vmatprep.subr.mxu0 0.0
    %279 = vmatpush1.msra.mxu0 0.0
    %280 = vmatprep.subr.mxu0 0.0
    %281 = vmatpush1.msra.mxu0 0.0
    %282 = vmatprep.mubr.f32.mxu0 0.0
    %v283 = vand.u32 %v129, 4294901760
    %284 = vmatmul.mubr.f32.gmra.mrb[0].mxu0 %v283
    %v285 = vpop.f32.mrb[0].mxu0
    %v286 = vadd.f32 %v205, %v285
    %v287 = vpop.f32.mrb[0].mxu0
    %288 = vdwg.mxu0
    %289 = vmatprep.subr.mxu0 0.0
    %v290 = vand.u32 %v119, 4294901760
    %v291 = vsub.f32 %v119, %v290
    %292 = vmatpush1.msra.mxu0 %v291
    %293 = vmatprep.subr.mxu0 0.0
    %v294 = vand.u32 %v120, 4294901760
    %v295 = vsub.f32 %v120, %v294
    %296 = vmatpush1.msra.mxu0 %v295
    %297 = vmatprep.subr.mxu0 0.0
    %298 = vmatpush1.msra.mxu0 0.0
    %299 = vmatprep.subr.mxu0 0.0
    %300 = vmatpush1.msra.mxu0 0.0
    %301 = vmatprep.subr.mxu0 0.0
    %302 = vmatpush1.msra.mxu0 0.0
    %303 = vmatprep.subr.mxu0 0.0
    %304 = vmatpush1.msra.mxu0 0.0
    %305 = vmatprep.subr.mxu0 0.0
    %306 = vmatpush1.msra.mxu0 0.0
    %307 = vmatprep.subr.mxu0 0.0
    %308 = vmatpush1.msra.mxu0 0.0
    %309 = vmatprep.subr.mxu0 0.0
    %310 = vmatpush1.msra.mxu0 0.0
    %311 = vmatprep.subr.mxu0 0.0
    %312 = vmatpush1.msra.mxu0 0.0
    %313 = vmatprep.subr.mxu0 0.0
    %314 = vmatpush1.msra.mxu0 0.0
    %315 = vmatprep.subr.mxu0 0.0
    %316 = vmatpush1.msra.mxu0 0.0
    %317 = vmatprep.subr.mxu0 0.0
    %318 = vmatpush1.msra.mxu0 0.0
    %319 = vmatprep.subr.mxu0 0.0
    %320 = vmatpush1.msra.mxu0 0.0
    %321 = vmatprep.subr.mxu0 0.0
    %322 = vmatpush1.msra.mxu0 0.0
    %323 = vmatprep.subr.mxu0 0.0
    %324 = vmatpush1.msra.mxu0 0.0
    %325 = vmatprep.subr.mxu0 0.0
    %326 = vmatpush1.msra.mxu0 0.0
    %327 = vmatprep.subr.mxu0 0.0
    %328 = vmatpush1.msra.mxu0 0.0
    %329 = vmatprep.subr.mxu0 0.0
    %330 = vmatpush1.msra.mxu0 0.0
    %331 = vmatprep.subr.mxu0 0.0
    %332 = vmatpush1.msra.mxu0 0.0
    %333 = vmatprep.subr.mxu0 0.0
    %334 = vmatpush1.msra.mxu0 0.0
    %335 = vmatprep.subr.mxu0 0.0
    %336 = vmatpush1.msra.mxu0 0.0
    %337 = vmatprep.subr.mxu0 0.0
    %338 = vmatpush1.msra.mxu0 0.0
    %339 = vmatprep.subr.mxu0 0.0
    %340 = vmatpush1.msra.mxu0 0.0
    %341 = vmatprep.subr.mxu0 0.0
    %342 = vmatpush1.msra.mxu0 0.0
    %343 = vmatprep.subr.mxu0 0.0
    %344 = vmatpush1.msra.mxu0 0.0
    %345 = vmatprep.subr.mxu0 0.0
    %346 = vmatpush1.msra.mxu0 0.0
    %347 = vmatprep.subr.mxu0 0.0
    %348 = vmatpush1.msra.mxu0 0.0
    %349 = vmatprep.subr.mxu0 0.0
    %350 = vmatpush1.msra.mxu0 0.0
    %351 = vmatprep.subr.mxu0 0.0
    %352 = vmatpush1.msra.mxu0 0.0
    %353 = vmatprep.subr.mxu0 0.0
    %354 = vmatpush1.msra.mxu0 0.0
    %355 = vmatprep.subr.mxu0 0.0
    %356 = vmatpush1.msra.mxu0 0.0
    %357 = vmatprep.mubr.f32.mxu0 0.0
    %v358 = vand.u32 %v129, 4294901760
    %v359 = vsub.f32 %v129, %v358
    %360 = vmatmul.mubr.f32.gmra.mrb[0].mxu0 %v359
    %v361 = vpop.f32.mrb[0].mxu0
    %v362 = vadd.f32 %v286, %v361
    %v363 = vpop.f32.mrb[0].mxu0
    %364 = vdwg.mxu0
    %365 = vmatprep.subr.mxu0 0.0
    %v366 = vand.u32 %v119, 4294901760
    %367 = vmatpush1.msra.mxu0 %v366
    %368 = vmatprep.subr.mxu0 0.0
    %v369 = vand.u32 %v120, 4294901760
    %370 = vmatpush1.msra.mxu0 %v369
    %371 = vmatprep.subr.mxu0 0.0
    %372 = vmatpush1.msra.mxu0 0.0
    %373 = vmatprep.subr.mxu0 0.0
    %374 = vmatpush1.msra.mxu0 0.0
    %375 = vmatprep.subr.mxu0 0.0
    %376 = vmatpush1.msra.mxu0 0.0
    %377 = vmatprep.subr.mxu0 0.0
    %378 = vmatpush1.msra.mxu0 0.0
    %379 = vmatprep.subr.mxu0 0.0
    %380 = vmatpush1.msra.mxu0 0.0
    %381 = vmatprep.subr.mxu0 0.0
    %382 = vmatpush1.msra.mxu0 0.0
    %383 = vmatprep.subr.mxu0 0.0
    %384 = vmatpush1.msra.mxu0 0.0
    %385 = vmatprep.subr.mxu0 0.0
    %386 = vmatpush1.msra.mxu0 0.0
    %387 = vmatprep.subr.mxu0 0.0
    %388 = vmatpush1.msra.mxu0 0.0
    %389 = vmatprep.subr.mxu0 0.0
    %390 = vmatpush1.msra.mxu0 0.0
    %391 = vmatprep.subr.mxu0 0.0
    %392 = vmatpush1.msra.mxu0 0.0
    %393 = vmatprep.subr.mxu0 0.0
    %394 = vmatpush1.msra.mxu0 0.0
    %395 = vmatprep.subr.mxu0 0.0
    %396 = vmatpush1.msra.mxu0 0.0
    %397 = vmatprep.subr.mxu0 0.0
    %398 = vmatpush1.msra.mxu0 0.0
    %399 = vmatprep.subr.mxu0 0.0
    %400 = vmatpush1.msra.mxu0 0.0
    %401 = vmatprep.subr.mxu0 0.0
    %402 = vmatpush1.msra.mxu0 0.0
    %403 = vmatprep.subr.mxu0 0.0
    %404 = vmatpush1.msra.mxu0 0.0
    %405 = vmatprep.subr.mxu0 0.0
    %406 = vmatpush1.msra.mxu0 0.0
    %407 = vmatprep.subr.mxu0 0.0
    %408 = vmatpush1.msra.mxu0 0.0
    %409 = vmatprep.subr.mxu0 0.0
    %410 = vmatpush1.msra.mxu0 0.0
    %411 = vmatprep.subr.mxu0 0.0
    %412 = vmatpush1.msra.mxu0 0.0
    %413 = vmatprep.subr.mxu0 0.0
    %414 = vmatpush1.msra.mxu0 0.0
    %415 = vmatprep.subr.mxu0 0.0
    %416 = vmatpush1.msra.mxu0 0.0
    %417 = vmatprep.subr.mxu0 0.0
    %418 = vmatpush1.msra.mxu0 0.0
    %419 = vmatprep.subr.mxu0 0.0
    %420 = vmatpush1.msra.mxu0 0.0
    %421 = vmatprep.subr.mxu0 0.0
    %422 = vmatpush1.msra.mxu0 0.0
    %423 = vmatprep.subr.mxu0 0.0
    %424 = vmatpush1.msra.mxu0 0.0
    %425 = vmatprep.subr.mxu0 0.0
    %426 = vmatpush1.msra.mxu0 0.0
    %427 = vmatprep.subr.mxu0 0.0
    %428 = vmatpush1.msra.mxu0 0.0
    %429 = vmatprep.subr.mxu0 0.0
    %430 = vmatpush1.msra.mxu0 0.0
    %431 = vmatprep.mubr.f32.mxu0 0.0
    %v432 = vand.u32 %v129, 4294901760
    %v433 = vsub.f32 %v129, %v432
    %v434 = vand.u32 %v433, 4294901760
    %435 = vmatmul.mubr.f32.gmra.mrb[0].mxu0 %v434
    %v436 = vpop.f32.mrb[0].mxu0
    %v437 = vadd.f32 %v362, %v436
    %v438 = vpop.f32.mrb[0].mxu0
    %439 = vdwg.mxu0
    %440 = vmatprep.subr.mxu0 0.0
    %v441 = vand.u32 %v119, 4294901760
    %v442 = vsub.f32 %v119, %v441
    %v443 = vand.u32 %v442, 4294901760
    %444 = vmatpush1.msra.mxu0 %v443
    %445 = vmatprep.subr.mxu0 0.0
    %v446 = vand.u32 %v120, 4294901760
    %v447 = vsub.f32 %v120, %v446
    %v448 = vand.u32 %v447, 4294901760
    %449 = vmatpush1.msra.mxu0 %v448
    %450 = vmatprep.subr.mxu0 0.0
    %451 = vmatpush1.msra.mxu0 0.0
    %452 = vmatprep.subr.mxu0 0.0
    %453 = vmatpush1.msra.mxu0 0.0
    %454 = vmatprep.subr.mxu0 0.0
    %455 = vmatpush1.msra.mxu0 0.0
    %456 = vmatprep.subr.mxu0 0.0
    %457 = vmatpush1.msra.mxu0 0.0
    %458 = vmatprep.subr.mxu0 0.0
    %459 = vmatpush1.msra.mxu0 0.0
    %460 = vmatprep.subr.mxu0 0.0
    %461 = vmatpush1.msra.mxu0 0.0
    %462 = vmatprep.subr.mxu0 0.0
    %463 = vmatpush1.msra.mxu0 0.0
    %464 = vmatprep.subr.mxu0 0.0
    %465 = vmatpush1.msra.mxu0 0.0
    %466 = vmatprep.subr.mxu0 0.0
    %467 = vmatpush1.msra.mxu0 0.0
    %468 = vmatprep.subr.mxu0 0.0
    %469 = vmatpush1.msra.mxu0 0.0
    %470 = vmatprep.subr.mxu0 0.0
    %471 = vmatpush1.msra.mxu0 0.0
    %472 = vmatprep.subr.mxu0 0.0
    %473 = vmatpush1.msra.mxu0 0.0
    %474 = vmatprep.subr.mxu0 0.0
    %475 = vmatpush1.msra.mxu0 0.0
    %476 = vmatprep.subr.mxu0 0.0
    %477 = vmatpush1.msra.mxu0 0.0
    %478 = vmatprep.subr.mxu0 0.0
    %479 = vmatpush1.msra.mxu0 0.0
    %480 = vmatprep.subr.mxu0 0.0
    %481 = vmatpush1.msra.mxu0 0.0
    %482 = vmatprep.subr.mxu0 0.0
    %483 = vmatpush1.msra.mxu0 0.0
    %484 = vmatprep.subr.mxu0 0.0
    %485 = vmatpush1.msra.mxu0 0.0
    %486 = vmatprep.subr.mxu0 0.0
    %487 = vmatpush1.msra.mxu0 0.0
    %488 = vmatprep.subr.mxu0 0.0
    %489 = vmatpush1.msra.mxu0 0.0
    %490 = vmatprep.subr.mxu0 0.0
    %491 = vmatpush1.msra.mxu0 0.0
    %492 = vmatprep.subr.mxu0 0.0
    %493 = vmatpush1.msra.mxu0 0.0
    %494 = vmatprep.subr.mxu0 0.0
    %495 = vmatpush1.msra.mxu0 0.0
    %496 = vmatprep.subr.mxu0 0.0
    %497 = vmatpush1.msra.mxu0 0.0
    %498 = vmatprep.subr.mxu0 0.0
    %499 = vmatpush1.msra.mxu0 0.0
    %500 = vmatprep.subr.mxu0 0.0
    %501 = vmatpush1.msra.mxu0 0.0
    %502 = vmatprep.subr.mxu0 0.0
    %503 = vmatpush1.msra.mxu0 0.0
    %504 = vmatprep.subr.mxu0 0.0
    %505 = vmatpush1.msra.mxu0 0.0
    %506 = vmatprep.subr.mxu0 0.0
    %507 = vmatpush1.msra.mxu0 0.0
    %508 = vmatprep.subr.mxu0 0.0
    %509 = vmatpush1.msra.mxu0 0.0
    %510 = vmatprep.mubr.f32.mxu0 0.0
    %v511 = vand.u32 %v129, 4294901760
    %512 = vmatmul.mubr.f32.gmra.mrb[0].mxu0 %v511
    %v513 = vpop.f32.mrb[0].mxu0
    %v514 = vadd.f32 %v437, %v513
    %v515 = vpop.f32.mrb[0].mxu0
    %516 = vdwg.mxu0
    %517 = vmatprep.subr.mxu0 0.0
    %v518 = vand.u32 %v119, 4294901760
    %519 = vmatpush1.msra.mxu0 %v518
    %520 = vmatprep.subr.mxu0 0.0
    %v521 = vand.u32 %v120, 4294901760
    %522 = vmatpush1.msra.mxu0 %v521
    %523 = vmatprep.subr.mxu0 0.0
    %524 = vmatpush1.msra.mxu0 0.0
    %525 = vmatprep.subr.mxu0 0.0
    %526 = vmatpush1.msra.mxu0 0.0
    %527 = vmatprep.subr.mxu0 0.0
    %528 = vmatpush1.msra.mxu0 0.0
    %529 = vmatprep.subr.mxu0 0.0
    %530 = vmatpush1.msra.mxu0 0.0
    %531 = vmatprep.subr.mxu0 0.0
    %532 = vmatpush1.msra.mxu0 0.0
    %533 = vmatprep.subr.mxu0 0.0
    %534 = vmatpush1.msra.mxu0 0.0
    %535 = vmatprep.subr.mxu0 0.0
    %536 = vmatpush1.msra.mxu0 0.0
    %537 = vmatprep.subr.mxu0 0.0
    %538 = vmatpush1.msra.mxu0 0.0
    %539 = vmatprep.subr.mxu0 0.0
    %540 = vmatpush1.msra.mxu0 0.0
    %541 = vmatprep.subr.mxu0 0.0
    %542 = vmatpush1.msra.mxu0 0.0
    %543 = vmatprep.subr.mxu0 0.0
    %544 = vmatpush1.msra.mxu0 0.0
    %545 = vmatprep.subr.mxu0 0.0
    %546 = vmatpush1.msra.mxu0 0.0
    %547 = vmatprep.subr.mxu0 0.0
    %548 = vmatpush1.msra.mxu0 0.0
    %549 = vmatprep.subr.mxu0 0.0
    %550 = vmatpush1.msra.mxu0 0.0
    %551 = vmatprep.subr.mxu0 0.0
    %552 = vmatpush1.msra.mxu0 0.0
    %553 = vmatprep.subr.mxu0 0.0
    %554 = vmatpush1.msra.mxu0 0.0
    %555 = vmatprep.subr.mxu0 0.0
    %556 = vmatpush1.msra.mxu0 0.0
    %557 = vmatprep.subr.mxu0 0.0
    %558 = vmatpush1.msra.mxu0 0.0
    %559 = vmatprep.subr.mxu0 0.0
    %560 = vmatpush1.msra.mxu0 0.0
    %561 = vmatprep.subr.mxu0 0.0
    %562 = vmatpush1.msra.mxu0 0.0
    %563 = vmatprep.subr.mxu0 0.0
    %564 = vmatpush1.msra.mxu0 0.0
    %565 = vmatprep.subr.mxu0 0.0
    %566 = vmatpush1.msra.mxu0 0.0
    %567 = vmatprep.subr.mxu0 0.0
    %568 = vmatpush1.msra.mxu0 0.0
    %569 = vmatprep.subr.mxu0 0.0
    %570 = vmatpush1.msra.mxu0 0.0
    %571 = vmatprep.subr.mxu0 0.0
    %572 = vmatpush1.msra.mxu0 0.0
    %573 = vmatprep.subr.mxu0 0.0
    %574 = vmatpush1.msra.mxu0 0.0
    %575 = vmatprep.subr.mxu0 0.0
    %576 = vmatpush1.msra.mxu0 0.0
    %577 = vmatprep.subr.mxu0 0.0
    %578 = vmatpush1.msra.mxu0 0.0
    %579 = vmatprep.subr.mxu0 0.0
    %580 = vmatpush1.msra.mxu0 0.0
    %581 = vmatprep.subr.mxu0 0.0
    %582 = vmatpush1.msra.mxu0 0.0
    %583 = vmatprep.mubr.f32.mxu0 0.0
    %v584 = vand.u32 %v129, 4294901760
    %585 = vmatmul.mubr.f32.gmra.mrb[0].mxu0 %v584
    %v586 = vpop.f32.mrb[0].mxu0
    %v587 = vadd.f32 %v514, %v586
    %v588 = vpop.f32.mrb[0].mxu0
    %589 = vdwg.mxu0
    %vm590 = vcmp.gt.f32.partialorder %v587, 0.0
    %v591 = vmin.f32 %v587, 0.0
    %v592 = vmul.f32 %v591, 1.442695
    %v593 = vpow.pop %v592
    %v594 = vsub.f32 %v593, 1.0
    %v595 = vsel %vm590, %v587, %v594
    %v596 = vld [vmem:[#allocation8] sm:$0xff]
    %v597 = vld [vmem:[#allocation8 + $0x8] sm:$0xff]
    %v598 = vld [vmem:[#allocation10] sm:$0xff]
    %v599 = vld [vmem:[#allocation10 + $0x8] sm:$0xff]
    %601 = vset.pattern.permute.xlu0 0
    %602 = vperm.xlu0 %601, %v598
    %v603 = vpop.permute.xlu0 %602
    %606 = vset.pattern.permute.xlu0 0
    %607 = vperm.xlu0 %606, %v599
    %v608 = vpop.permute.xlu0 %607
    %vm610 = vcmask 64512
    %v612 = vsel %vm610, %v596, 0
    %v615 = vsel %vm610, %v597, 0
    %617 = vmatprep.subr.mxu0 0.0
    %v618 = vand.u32 %v595, 4294901760
    %619 = vmatpush1.msra.mxu0 %v618
    %620 = vmatprep.subr.mxu0 0.0
    %621 = vmatpush1.msra.mxu0 0.0
    %622 = vmatprep.subr.mxu0 0.0
    %623 = vmatpush1.msra.mxu0 0.0
    %624 = vmatprep.subr.mxu0 0.0
    %625 = vmatpush1.msra.mxu0 0.0
    %626 = vmatprep.subr.mxu0 0.0
    %627 = vmatpush1.msra.mxu0 0.0
    %628 = vmatprep.subr.mxu0 0.0
    %629 = vmatpush1.msra.mxu0 0.0
    %630 = vmatprep.subr.mxu0 0.0
    %631 = vmatpush1.msra.mxu0 0.0
    %632 = vmatprep.subr.mxu0 0.0
    %633 = vmatpush1.msra.mxu0 0.0
    %634 = vmatprep.subr.mxu0 0.0
    %635 = vmatpush1.msra.mxu0 0.0
    %636 = vmatprep.subr.mxu0 0.0
    %637 = vmatpush1.msra.mxu0 0.0
    %638 = vmatprep.subr.mxu0 0.0
    %639 = vmatpush1.msra.mxu0 0.0
    %640 = vmatprep.subr.mxu0 0.0
    %641 = vmatpush1.msra.mxu0 0.0
    %642 = vmatprep.subr.mxu0 0.0
    %643 = vmatpush1.msra.mxu0 0.0
    %644 = vmatprep.subr.mxu0 0.0
    %645 = vmatpush1.msra.mxu0 0.0
    %646 = vmatprep.subr.mxu0 0.0
    %647 = vmatpush1.msra.mxu0 0.0
    %648 = vmatprep.subr.mxu0 0.0
    %649 = vmatpush1.msra.mxu0 0.0
    %650 = vmatprep.subr.mxu0 0.0
    %651 = vmatpush1.msra.mxu0 0.0
    %652 = vmatprep.subr.mxu0 0.0
    %653 = vmatpush1.msra.mxu0 0.0
    %654 = vmatprep.subr.mxu0 0.0
    %655 = vmatpush1.msra.mxu0 0.0
    %656 = vmatprep.subr.mxu0 0.0
    %657 = vmatpush1.msra.mxu0 0.0
    %658 = vmatprep.subr.mxu0 0.0
    %659 = vmatpush1.msra.mxu0 0.0
    %660 = vmatprep.subr.mxu0 0.0
    %661 = vmatpush1.msra.mxu0 0.0
    %662 = vmatprep.subr.mxu0 0.0
    %663 = vmatpush1.msra.mxu0 0.0
    %664 = vmatprep.subr.mxu0 0.0
    %665 = vmatpush1.msra.mxu0 0.0
    %666 = vmatprep.subr.mxu0 0.0
    %667 = vmatpush1.msra.mxu0 0.0
    %668 = vmatprep.subr.mxu0 0.0
    %669 = vmatpush1.msra.mxu0 0.0
    %670 = vmatprep.subr.mxu0 0.0
    %671 = vmatpush1.msra.mxu0 0.0
    %672 = vmatprep.subr.mxu0 0.0
    %673 = vmatpush1.msra.mxu0 0.0
    %674 = vmatprep.subr.mxu0 0.0
    %675 = vmatpush1.msra.mxu0 0.0
    %676 = vmatprep.subr.mxu0 0.0
    %677 = vmatpush1.msra.mxu0 0.0
    %678 = vmatprep.subr.mxu0 0.0
    %679 = vmatpush1.msra.mxu0 0.0
    %680 = vmatprep.subr.mxu0 0.0
    %681 = vmatpush1.msra.mxu0 0.0
    %682 = vmatprep.mubr.f32.mxu0 0.0
    %v683 = vand.u32 %v612, 4294901760
    %v684 = vsub.f32 %v612, %v683
    %v685 = vand.u32 %v684, 4294901760
    %v686 = vsub.f32 %v684, %v685
    %v687 = vand.u32 %v686, 4294901760
    %688 = vmatmul.mubr.f32.gmra.mrb[0].mxu0 %v687
    %v689 = vpop.f32.mrb[0].mxu0
    %v690 = vadd.f32 %v603, %v689
    %v691 = vpop.f32.mrb[0].mxu0
    %692 = vmatprep.mubr.f32.mxu0 0.0
    %v693 = vand.u32 %v615, 4294901760
    %v694 = vsub.f32 %v615, %v693
    %v695 = vand.u32 %v694, 4294901760
    %v696 = vsub.f32 %v694, %v695
    %v697 = vand.u32 %v696, 4294901760
    %698 = vmatmul.mubr.f32.gmra.mrb[0].mxu0 %v697
    %v699 = vpop.f32.mrb[0].mxu0
    %v700 = vadd.f32 %v608, %v699
    %v701 = vpop.f32.mrb[0].mxu0
    %702 = vdwg.mxu0
    %703 = vmatprep.subr.mxu0 0.0
    %v704 = vand.u32 %v595, 4294901760
    %v705 = vsub.f32 %v595, %v704
    %v706 = vand.u32 %v705, 4294901760
    %v707 = vsub.f32 %v705, %v706
    %v708 = vand.u32 %v707, 4294901760
    %709 = vmatpush1.msra.mxu0 %v708
    %710 = vmatprep.subr.mxu0 0.0
    %711 = vmatpush1.msra.mxu0 0.0
    %712 = vmatprep.subr.mxu0 0.0
    %713 = vmatpush1.msra.mxu0 0.0
    %714 = vmatprep.subr.mxu0 0.0
    %715 = vmatpush1.msra.mxu0 0.0
    %716 = vmatprep.subr.mxu0 0.0
    %717 = vmatpush1.msra.mxu0 0.0
    %718 = vmatprep.subr.mxu0 0.0
    %719 = vmatpush1.msra.mxu0 0.0
    %720 = vmatprep.subr.mxu0 0.0
    %721 = vmatpush1.msra.mxu0 0.0
    %722 = vmatprep.subr.mxu0 0.0
    %723 = vmatpush1.msra.mxu0 0.0
    %724 = vmatprep.subr.mxu0 0.0
    %725 = vmatpush1.msra.mxu0 0.0
    %726 = vmatprep.subr.mxu0 0.0
    %727 = vmatpush1.msra.mxu0 0.0
    %728 = vmatprep.subr.mxu0 0.0
    %729 = vmatpush1.msra.mxu0 0.0
    %730 = vmatprep.subr.mxu0 0.0
    %731 = vmatpush1.msra.mxu0 0.0
    %732 = vmatprep.subr.mxu0 0.0
    %733 = vmatpush1.msra.mxu0 0.0
    %734 = vmatprep.subr.mxu0 0.0
    %735 = vmatpush1.msra.mxu0 0.0
    %736 = vmatprep.subr.mxu0 0.0
    %737 = vmatpush1.msra.mxu0 0.0
    %738 = vmatprep.subr.mxu0 0.0
    %739 = vmatpush1.msra.mxu0 0.0
    %740 = vmatprep.subr.mxu0 0.0
    %741 = vmatpush1.msra.mxu0 0.0
    %742 = vmatprep.subr.mxu0 0.0
    %743 = vmatpush1.msra.mxu0 0.0
    %744 = vmatprep.subr.mxu0 0.0
    %745 = vmatpush1.msra.mxu0 0.0
    %746 = vmatprep.subr.mxu0 0.0
    %747 = vmatpush1.msra.mxu0 0.0
    %748 = vmatprep.subr.mxu0 0.0
    %749 = vmatpush1.msra.mxu0 0.0
    %750 = vmatprep.subr.mxu0 0.0
    %751 = vmatpush1.msra.mxu0 0.0
    %752 = vmatprep.subr.mxu0 0.0
    %753 = vmatpush1.msra.mxu0 0.0
    %754 = vmatprep.subr.mxu0 0.0
    %755 = vmatpush1.msra.mxu0 0.0
    %756 = vmatprep.subr.mxu0 0.0
    %757 = vmatpush1.msra.mxu0 0.0
    %758 = vmatprep.subr.mxu0 0.0
    %759 = vmatpush1.msra.mxu0 0.0
    %760 = vmatprep.subr.mxu0 0.0
    %761 = vmatpush1.msra.mxu0 0.0
    %762 = vmatprep.subr.mxu0 0.0
    %763 = vmatpush1.msra.mxu0 0.0
    %764 = vmatprep.subr.mxu0 0.0
    %765 = vmatpush1.msra.mxu0 0.0
    %766 = vmatprep.subr.mxu0 0.0
    %767 = vmatpush1.msra.mxu0 0.0
    %768 = vmatprep.subr.mxu0 0.0
    %769 = vmatpush1.msra.mxu0 0.0
    %770 = vmatprep.subr.mxu0 0.0
    %771 = vmatpush1.msra.mxu0 0.0
    %772 = vmatprep.mubr.f32.mxu0 0.0
    %v773 = vand.u32 %v612, 4294901760
    %774 = vmatmul.mubr.f32.gmra.mrb[0].mxu0 %v773
    %v775 = vpop.f32.mrb[0].mxu0
    %v776 = vadd.f32 %v690, %v775
    %v777 = vpop.f32.mrb[0].mxu0
    %778 = vmatprep.mubr.f32.mxu0 0.0
    %v779 = vand.u32 %v615, 4294901760
    %780 = vmatmul.mubr.f32.gmra.mrb[0].mxu0 %v779
    %v781 = vpop.f32.mrb[0].mxu0
    %v782 = vadd.f32 %v700, %v781
    %v783 = vpop.f32.mrb[0].mxu0
    %784 = vdwg.mxu0
    %785 = vmatprep.subr.mxu0 0.0
    %v786 = vand.u32 %v595, 4294901760
    %v787 = vsub.f32 %v595, %v786
    %788 = vmatpush1.msra.mxu0 %v787
    %789 = vmatprep.subr.mxu0 0.0
    %790 = vmatpush1.msra.mxu0 0.0
    %791 = vmatprep.subr.mxu0 0.0
    %792 = vmatpush1.msra.mxu0 0.0
    %793 = vmatprep.subr.mxu0 0.0
    %794 = vmatpush1.msra.mxu0 0.0
    %795 = vmatprep.subr.mxu0 0.0
    %796 = vmatpush1.msra.mxu0 0.0
    %797 = vmatprep.subr.mxu0 0.0
    %798 = vmatpush1.msra.mxu0 0.0
    %799 = vmatprep.subr.mxu0 0.0
    %800 = vmatpush1.msra.mxu0 0.0
    %801 = vmatprep.subr.mxu0 0.0
    %802 = vmatpush1.msra.mxu0 0.0
    %803 = vmatprep.subr.mxu0 0.0
    %804 = vmatpush1.msra.mxu0 0.0
    %805 = vmatprep.subr.mxu0 0.0
    %806 = vmatpush1.msra.mxu0 0.0
    %807 = vmatprep.subr.mxu0 0.0
    %808 = vmatpush1.msra.mxu0 0.0
    %809 = vmatprep.subr.mxu0 0.0
    %810 = vmatpush1.msra.mxu0 0.0
    %811 = vmatprep.subr.mxu0 0.0
    %812 = vmatpush1.msra.mxu0 0.0
    %813 = vmatprep.subr.mxu0 0.0
    %814 = vmatpush1.msra.mxu0 0.0
    %815 = vmatprep.subr.mxu0 0.0
    %816 = vmatpush1.msra.mxu0 0.0
    %817 = vmatprep.subr.mxu0 0.0
    %818 = vmatpush1.msra.mxu0 0.0
    %819 = vmatprep.subr.mxu0 0.0
    %820 = vmatpush1.msra.mxu0 0.0
    %821 = vmatprep.subr.mxu0 0.0
    %822 = vmatpush1.msra.mxu0 0.0
    %823 = vmatprep.subr.mxu0 0.0
    %824 = vmatpush1.msra.mxu0 0.0
    %825 = vmatprep.subr.mxu0 0.0
    %826 = vmatpush1.msra.mxu0 0.0
    %827 = vmatprep.subr.mxu0 0.0
    %828 = vmatpush1.msra.mxu0 0.0
    %829 = vmatprep.subr.mxu0 0.0
    %830 = vmatpush1.msra.mxu0 0.0
    %831 = vmatprep.subr.mxu0 0.0
    %832 = vmatpush1.msra.mxu0 0.0
    %833 = vmatprep.subr.mxu0 0.0
    %834 = vmatpush1.msra.mxu0 0.0
    %835 = vmatprep.subr.mxu0 0.0
    %836 = vmatpush1.msra.mxu0 0.0
    %837 = vmatprep.subr.mxu0 0.0
    %838 = vmatpush1.msra.mxu0 0.0
    %839 = vmatprep.subr.mxu0 0.0
    %840 = vmatpush1.msra.mxu0 0.0
    %841 = vmatprep.subr.mxu0 0.0
    %842 = vmatpush1.msra.mxu0 0.0
    %843 = vmatprep.subr.mxu0 0.0
    %844 = vmatpush1.msra.mxu0 0.0
    %845 = vmatprep.subr.mxu0 0.0
    %846 = vmatpush1.msra.mxu0 0.0
    %847 = vmatprep.subr.mxu0 0.0
    %848 = vmatpush1.msra.mxu0 0.0
    %849 = vmatprep.subr.mxu0 0.0
    %850 = vmatpush1.msra.mxu0 0.0
    %851 = vmatprep.mubr.f32.mxu0 0.0
    %v852 = vand.u32 %v612, 4294901760
    %v853 = vsub.f32 %v612, %v852
    %854 = vmatmul.mubr.f32.gmra.mrb[0].mxu0 %v853
    %v855 = vpop.f32.mrb[0].mxu0
    %v856 = vadd.f32 %v776, %v855
    %v857 = vpop.f32.mrb[0].mxu0
    %858 = vmatprep.mubr.f32.mxu0 0.0
    %v859 = vand.u32 %v615, 4294901760
    %v860 = vsub.f32 %v615, %v859
    %861 = vmatmul.mubr.f32.gmra.mrb[0].mxu0 %v860
    %v862 = vpop.f32.mrb[0].mxu0
    %v863 = vadd.f32 %v782, %v862
    %v864 = vpop.f32.mrb[0].mxu0
    %865 = vdwg.mxu0
    %866 = vmatprep.subr.mxu0 0.0
    %v867 = vand.u32 %v595, 4294901760
    %868 = vmatpush1.msra.mxu0 %v867
    %869 = vmatprep.subr.mxu0 0.0
    %870 = vmatpush1.msra.mxu0 0.0
    %871 = vmatprep.subr.mxu0 0.0
    %872 = vmatpush1.msra.mxu0 0.0
    %873 = vmatprep.subr.mxu0 0.0
    %874 = vmatpush1.msra.mxu0 0.0
    %875 = vmatprep.subr.mxu0 0.0
    %876 = vmatpush1.msra.mxu0 0.0
    %877 = vmatprep.subr.mxu0 0.0
    %878 = vmatpush1.msra.mxu0 0.0
    %879 = vmatprep.subr.mxu0 0.0
    %880 = vmatpush1.msra.mxu0 0.0
    %881 = vmatprep.subr.mxu0 0.0
    %882 = vmatpush1.msra.mxu0 0.0
    %883 = vmatprep.subr.mxu0 0.0
    %884 = vmatpush1.msra.mxu0 0.0
    %885 = vmatprep.subr.mxu0 0.0
    %886 = vmatpush1.msra.mxu0 0.0
    %887 = vmatprep.subr.mxu0 0.0
    %888 = vmatpush1.msra.mxu0 0.0
    %889 = vmatprep.subr.mxu0 0.0
    %890 = vmatpush1.msra.mxu0 0.0
    %891 = vmatprep.subr.mxu0 0.0
    %892 = vmatpush1.msra.mxu0 0.0
    %893 = vmatprep.subr.mxu0 0.0
    %894 = vmatpush1.msra.mxu0 0.0
    %895 = vmatprep.subr.mxu0 0.0
    %896 = vmatpush1.msra.mxu0 0.0
    %897 = vmatprep.subr.mxu0 0.0
    %898 = vmatpush1.msra.mxu0 0.0
    %899 = vmatprep.subr.mxu0 0.0
    %900 = vmatpush1.msra.mxu0 0.0
    %901 = vmatprep.subr.mxu0 0.0
    %902 = vmatpush1.msra.mxu0 0.0
    %903 = vmatprep.subr.mxu0 0.0
    %904 = vmatpush1.msra.mxu0 0.0
    %905 = vmatprep.subr.mxu0 0.0
    %906 = vmatpush1.msra.mxu0 0.0
    %907 = vmatprep.subr.mxu0 0.0
    %908 = vmatpush1.msra.mxu0 0.0
    %909 = vmatprep.subr.mxu0 0.0
    %910 = vmatpush1.msra.mxu0 0.0
    %911 = vmatprep.subr.mxu0 0.0
    %912 = vmatpush1.msra.mxu0 0.0
    %913 = vmatprep.subr.mxu0 0.0
    %914 = vmatpush1.msra.mxu0 0.0
    %915 = vmatprep.subr.mxu0 0.0
    %916 = vmatpush1.msra.mxu0 0.0
    %917 = vmatprep.subr.mxu0 0.0
    %918 = vmatpush1.msra.mxu0 0.0
    %919 = vmatprep.subr.mxu0 0.0
    %920 = vmatpush1.msra.mxu0 0.0
    %921 = vmatprep.subr.mxu0 0.0
    %922 = vmatpush1.msra.mxu0 0.0
    %923 = vmatprep.subr.mxu0 0.0
    %924 = vmatpush1.msra.mxu0 0.0
    %925 = vmatprep.subr.mxu0 0.0
    %926 = vmatpush1.msra.mxu0 0.0
    %927 = vmatprep.subr.mxu0 0.0
    %928 = vmatpush1.msra.mxu0 0.0
    %929 = vmatprep.subr.mxu0 0.0
    %930 = vmatpush1.msra.mxu0 0.0
    %931 = vmatprep.mubr.f32.mxu0 0.0
    %v932 = vand.u32 %v612, 4294901760
    %v933 = vsub.f32 %v612, %v932
    %v934 = vand.u32 %v933, 4294901760
    %935 = vmatmul.mubr.f32.gmra.mrb[0].mxu0 %v934
    %v936 = vpop.f32.mrb[0].mxu0
    %v937 = vadd.f32 %v856, %v936
    %v938 = vpop.f32.mrb[0].mxu0
    %939 = vmatprep.mubr.f32.mxu0 0.0
    %v940 = vand.u32 %v615, 4294901760
    %v941 = vsub.f32 %v615, %v940
    %v942 = vand.u32 %v941, 4294901760
    %943 = vmatmul.mubr.f32.gmra.mrb[0].mxu0 %v942
    %v944 = vpop.f32.mrb[0].mxu0
    %v945 = vadd.f32 %v863, %v944
    %v946 = vpop.f32.mrb[0].mxu0
    %947 = vdwg.mxu0
    %948 = vmatprep.subr.mxu0 0.0
    %v949 = vand.u32 %v595, 4294901760
    %v950 = vsub.f32 %v595, %v949
    %v951 = vand.u32 %v950, 4294901760
    %952 = vmatpush1.msra.mxu0 %v951
    %953 = vmatprep.subr.mxu0 0.0
    %954 = vmatpush1.msra.mxu0 0.0
    %955 = vmatprep.subr.mxu0 0.0
    %956 = vmatpush1.msra.mxu0 0.0
    %957 = vmatprep.subr.mxu0 0.0
    %958 = vmatpush1.msra.mxu0 0.0
    %959 = vmatprep.subr.mxu0 0.0
    %960 = vmatpush1.msra.mxu0 0.0
    %961 = vmatprep.subr.mxu0 0.0
    %962 = vmatpush1.msra.mxu0 0.0
    %963 = vmatprep.subr.mxu0 0.0
    %964 = vmatpush1.msra.mxu0 0.0
    %965 = vmatprep.subr.mxu0 0.0
    %966 = vmatpush1.msra.mxu0 0.0
    %967 = vmatprep.subr.mxu0 0.0
    %968 = vmatpush1.msra.mxu0 0.0
    %969 = vmatprep.subr.mxu0 0.0
    %970 = vmatpush1.msra.mxu0 0.0
    %971 = vmatprep.subr.mxu0 0.0
    %972 = vmatpush1.msra.mxu0 0.0
    %973 = vmatprep.subr.mxu0 0.0
    %974 = vmatpush1.msra.mxu0 0.0
    %975 = vmatprep.subr.mxu0 0.0
    %976 = vmatpush1.msra.mxu0 0.0
    %977 = vmatprep.subr.mxu0 0.0
    %978 = vmatpush1.msra.mxu0 0.0
    %979 = vmatprep.subr.mxu0 0.0
    %980 = vmatpush1.msra.mxu0 0.0
    %981 = vmatprep.subr.mxu0 0.0
    %982 = vmatpush1.msra.mxu0 0.0
    %983 = vmatprep.subr.mxu0 0.0
    %984 = vmatpush1.msra.mxu0 0.0
    %985 = vmatprep.subr.mxu0 0.0
    %986 = vmatpush1.msra.mxu0 0.0
    %987 = vmatprep.subr.mxu0 0.0
    %988 = vmatpush1.msra.mxu0 0.0
    %989 = vmatprep.subr.mxu0 0.0
    %990 = vmatpush1.msra.mxu0 0.0
    %991 = vmatprep.subr.mxu0 0.0
    %992 = vmatpush1.msra.mxu0 0.0
    %993 = vmatprep.subr.mxu0 0.0
    %994 = vmatpush1.msra.mxu0 0.0
    %995 = vmatprep.subr.mxu0 0.0
    %996 = vmatpush1.msra.mxu0 0.0
    %997 = vmatprep.subr.mxu0 0.0
    %998 = vmatpush1.msra.mxu0 0.0
    %999 = vmatprep.subr.mxu0 0.0
    %1000 = vmatpush1.msra.mxu0 0.0
    %1001 = vmatprep.subr.mxu0 0.0
    %1002 = vmatpush1.msra.mxu0 0.0
    %1003 = vmatprep.subr.mxu0 0.0
    %1004 = vmatpush1.msra.mxu0 0.0
    %1005 = vmatprep.subr.mxu0 0.0
    %1006 = vmatpush1.msra.mxu0 0.0
    %1007 = vmatprep.subr.mxu0 0.0
    %1008 = vmatpush1.msra.mxu0 0.0
    %1009 = vmatprep.subr.mxu0 0.0
    %1010 = vmatpush1.msra.mxu0 0.0
    %1011 = vmatprep.subr.mxu0 0.0
    %1012 = vmatpush1.msra.mxu0 0.0
    %1013 = vmatprep.subr.mxu0 0.0
    %1014 = vmatpush1.msra.mxu0 0.0
    %1015 = vmatprep.mubr.f32.mxu0 0.0
    %v1016 = vand.u32 %v612, 4294901760
    %1017 = vmatmul.mubr.f32.gmra.mrb[0].mxu0 %v1016
    %v1018 = vpop.f32.mrb[0].mxu0
    %v1019 = vadd.f32 %v937, %v1018
    %v1020 = vpop.f32.mrb[0].mxu0
    %1021 = vmatprep.mubr.f32.mxu0 0.0
    %v1022 = vand.u32 %v615, 4294901760
    %1023 = vmatmul.mubr.f32.gmra.mrb[0].mxu0 %v1022
    %v1024 = vpop.f32.mrb[0].mxu0
    %v1025 = vadd.f32 %v945, %v1024
    %v1026 = vpop.f32.mrb[0].mxu0
    %1027 = vdwg.mxu0
    %1028 = vmatprep.subr.mxu0 0.0
    %v1029 = vand.u32 %v595, 4294901760
    %1030 = vmatpush1.msra.mxu0 %v1029
    %1031 = vmatprep.subr.mxu0 0.0
    %1032 = vmatpush1.msra.mxu0 0.0
    %1033 = vmatprep.subr.mxu0 0.0
    %1034 = vmatpush1.msra.mxu0 0.0
    %1035 = vmatprep.subr.mxu0 0.0
    %1036 = vmatpush1.msra.mxu0 0.0
    %1037 = vmatprep.subr.mxu0 0.0
    %1038 = vmatpush1.msra.mxu0 0.0
    %1039 = vmatprep.subr.mxu0 0.0
    %1040 = vmatpush1.msra.mxu0 0.0
    %1041 = vmatprep.subr.mxu0 0.0
    %1042 = vmatpush1.msra.mxu0 0.0
    %1043 = vmatprep.subr.mxu0 0.0
    %1044 = vmatpush1.msra.mxu0 0.0
    %1045 = vmatprep.subr.mxu0 0.0
    %1046 = vmatpush1.msra.mxu0 0.0
    %1047 = vmatprep.subr.mxu0 0.0
    %1048 = vmatpush1.msra.mxu0 0.0
    %1049 = vmatprep.subr.mxu0 0.0
    %1050 = vmatpush1.msra.mxu0 0.0
    %1051 = vmatprep.subr.mxu0 0.0
    %1052 = vmatpush1.msra.mxu0 0.0
    %1053 = vmatprep.subr.mxu0 0.0
    %1054 = vmatpush1.msra.mxu0 0.0
    %1055 = vmatprep.subr.mxu0 0.0
    %1056 = vmatpush1.msra.mxu0 0.0
    %1057 = vmatprep.subr.mxu0 0.0
    %1058 = vmatpush1.msra.mxu0 0.0
    %1059 = vmatprep.subr.mxu0 0.0
    %1060 = vmatpush1.msra.mxu0 0.0
    %1061 = vmatprep.subr.mxu0 0.0
    %1062 = vmatpush1.msra.mxu0 0.0
    %1063 = vmatprep.subr.mxu0 0.0
    %1064 = vmatpush1.msra.mxu0 0.0
    %1065 = vmatprep.subr.mxu0 0.0
    %1066 = vmatpush1.msra.mxu0 0.0
    %1067 = vmatprep.subr.mxu0 0.0
    %1068 = vmatpush1.msra.mxu0 0.0
    %1069 = vmatprep.subr.mxu0 0.0
    %1070 = vmatpush1.msra.mxu0 0.0
    %1071 = vmatprep.subr.mxu0 0.0
    %1072 = vmatpush1.msra.mxu0 0.0
    %1073 = vmatprep.subr.mxu0 0.0
    %1074 = vmatpush1.msra.mxu0 0.0
    %1075 = vmatprep.subr.mxu0 0.0
    %1076 = vmatpush1.msra.mxu0 0.0
    %1077 = vmatprep.subr.mxu0 0.0
    %1078 = vmatpush1.msra.mxu0 0.0
    %1079 = vmatprep.subr.mxu0 0.0
    %1080 = vmatpush1.msra.mxu0 0.0
    %1081 = vmatprep.subr.mxu0 0.0
    %1082 = vmatpush1.msra.mxu0 0.0
    %1083 = vmatprep.subr.mxu0 0.0
    %1084 = vmatpush1.msra.mxu0 0.0
    %1085 = vmatprep.subr.mxu0 0.0
    %1086 = vmatpush1.msra.mxu0 0.0
    %1087 = vmatprep.subr.mxu0 0.0
    %1088 = vmatpush1.msra.mxu0 0.0
    %1089 = vmatprep.subr.mxu0 0.0
    %1090 = vmatpush1.msra.mxu0 0.0
    %1091 = vmatprep.subr.mxu0 0.0
    %1092 = vmatpush1.msra.mxu0 0.0
    %1093 = vmatprep.mubr.f32.mxu0 0.0
    %v1094 = vand.u32 %v612, 4294901760
    %1095 = vmatmul.mubr.f32.gmra.mrb[0].mxu0 %v1094
    %v1096 = vpop.f32.mrb[0].mxu0
    %v1097 = vadd.f32 %v1019, %v1096
    %v1098 = vpop.f32.mrb[0].mxu0
    %1099 = vmatprep.mubr.f32.mxu0 0.0
    %v1100 = vand.u32 %v615, 4294901760
    %1101 = vmatmul.mubr.f32.gmra.mrb[0].mxu0 %v1100
    %v1102 = vpop.f32.mrb[0].mxu0
    %v1103 = vadd.f32 %v1025, %v1102
    %v1104 = vpop.f32.mrb[0].mxu0
    %1105 = vdwg.mxu0
    %vm1106 = vcmp.gt.f32.partialorder %v1097, 0.0
    %vm1107 = vcmp.gt.f32.partialorder %v1103, 0.0
    %v1108 = vmin.f32 %v1097, 0.0
    %v1109 = vmin.f32 %v1103, 0.0
    %v1110 = vmul.f32 %v1108, 1.442695
    %v1111 = vpow.pop %v1110
    %v1112 = vmul.f32 %v1109, 1.442695
    %v1113 = vpow.pop %v1112
    %v1114 = vsub.f32 %v1111, 1.0
    %v1115 = vsub.f32 %v1113, 1.0
    %v1116 = vsel %vm1106, %v1097, %v1114
    %v1117 = vsel %vm1107, %v1103, %v1115
    %v1118 = vld [vmem:[#allocation11] sm:$0xff]
    %v1119 = vld [vmem:[#allocation11 + $0x8] sm:$0xff]
    %v1120 = vld [vmem:[#allocation13] sm:$0xff]
    %v1121 = vld [vmem:[#allocation13 + $0x8] sm:$0xff]
    %1123 = vset.pattern.permute.xlu0 0
    %1124 = vperm.xlu0 %1123, %v1120
    %v1125 = vpop.permute.xlu0 %1124
    %1128 = vset.pattern.permute.xlu0 0
    %1129 = vperm.xlu0 %1128, %v1121
    %v1130 = vpop.permute.xlu0 %1129
    %v1133 = vsel %vm127, %v1118, 0
    %v1136 = vsel %vm127, %v1119, 0
    %1138 = vmatprep.subr.mxu0 0.0
    %v1139 = vand.u32 %v1116, 4294901760
    %1140 = vmatpush1.msra.mxu0 %v1139
    %1141 = vmatprep.subr.mxu0 0.0
    %v1142 = vand.u32 %v1117, 4294901760
    %1143 = vmatpush1.msra.mxu0 %v1142
    %1144 = vmatprep.subr.mxu0 0.0
    %1145 = vmatpush1.msra.mxu0 0.0
    %1146 = vmatprep.subr.mxu0 0.0
    %1147 = vmatpush1.msra.mxu0 0.0
    %1148 = vmatprep.subr.mxu0 0.0
    %1149 = vmatpush1.msra.mxu0 0.0
    %1150 = vmatprep.subr.mxu0 0.0
    %1151 = vmatpush1.msra.mxu0 0.0
    %1152 = vmatprep.subr.mxu0 0.0
    %1153 = vmatpush1.msra.mxu0 0.0
    %1154 = vmatprep.subr.mxu0 0.0
    %1155 = vmatpush1.msra.mxu0 0.0
    %1156 = vmatprep.subr.mxu0 0.0
    %1157 = vmatpush1.msra.mxu0 0.0
    %1158 = vmatprep.subr.mxu0 0.0
    %1159 = vmatpush1.msra.mxu0 0.0
    %1160 = vmatprep.subr.mxu0 0.0
    %1161 = vmatpush1.msra.mxu0 0.0
    %1162 = vmatprep.subr.mxu0 0.0
    %1163 = vmatpush1.msra.mxu0 0.0
    %1164 = vmatprep.subr.mxu0 0.0
    %1165 = vmatpush1.msra.mxu0 0.0
    %1166 = vmatprep.subr.mxu0 0.0
    %1167 = vmatpush1.msra.mxu0 0.0
    %1168 = vmatprep.subr.mxu0 0.0
    %1169 = vmatpush1.msra.mxu0 0.0
    %1170 = vmatprep.subr.mxu0 0.0
    %1171 = vmatpush1.msra.mxu0 0.0
    %1172 = vmatprep.subr.mxu0 0.0
    %1173 = vmatpush1.msra.mxu0 0.0
    %1174 = vmatprep.subr.mxu0 0.0
    %1175 = vmatpush1.msra.mxu0 0.0
    %1176 = vmatprep.subr.mxu0 0.0
    %1177 = vmatpush1.msra.mxu0 0.0
    %1178 = vmatprep.subr.mxu0 0.0
    %1179 = vmatpush1.msra.mxu0 0.0
    %1180 = vmatprep.subr.mxu0 0.0
    %1181 = vmatpush1.msra.mxu0 0.0
    %1182 = vmatprep.subr.mxu0 0.0
    %1183 = vmatpush1.msra.mxu0 0.0
    %1184 = vmatprep.subr.mxu0 0.0
    %1185 = vmatpush1.msra.mxu0 0.0
    %1186 = vmatprep.subr.mxu0 0.0
    %1187 = vmatpush1.msra.mxu0 0.0
    %1188 = vmatprep.subr.mxu0 0.0
    %1189 = vmatpush1.msra.mxu0 0.0
    %1190 = vmatprep.subr.mxu0 0.0
    %1191 = vmatpush1.msra.mxu0 0.0
    %1192 = vmatprep.subr.mxu0 0.0
    %1193 = vmatpush1.msra.mxu0 0.0
    %1194 = vmatprep.subr.mxu0 0.0
    %1195 = vmatpush1.msra.mxu0 0.0
    %1196 = vmatprep.subr.mxu0 0.0
    %1197 = vmatpush1.msra.mxu0 0.0
    %1198 = vmatprep.subr.mxu0 0.0
    %1199 = vmatpush1.msra.mxu0 0.0
    %1200 = vmatprep.subr.mxu0 0.0
    %1201 = vmatpush1.msra.mxu0 0.0
    %1202 = vmatprep.subr.mxu0 0.0
    %1203 = vmatpush1.msra.mxu0 0.0
    %1204 = vmatprep.mubr.f32.mxu0 0.0
    %v1205 = vand.u32 %v1133, 4294901760
    %v1206 = vsub.f32 %v1133, %v1205
    %v1207 = vand.u32 %v1206, 4294901760
    %v1208 = vsub.f32 %v1206, %v1207
    %v1209 = vand.u32 %v1208, 4294901760
    %1210 = vmatmul.mubr.f32.gmra.mrb[0].mxu0 %v1209
    %v1211 = vpop.f32.mrb[0].mxu0
    %v1212 = vadd.f32 %v1125, %v1211
    %v1213 = vpop.f32.mrb[0].mxu0
    %1214 = vmatprep.mubr.f32.mxu0 0.0
    %v1215 = vand.u32 %v1136, 4294901760
    %v1216 = vsub.f32 %v1136, %v1215
    %v1217 = vand.u32 %v1216, 4294901760
    %v1218 = vsub.f32 %v1216, %v1217
    %v1219 = vand.u32 %v1218, 4294901760
    %1220 = vmatmul.mubr.f32.gmra.mrb[0].mxu0 %v1219
    %v1221 = vpop.f32.mrb[0].mxu0
    %v1222 = vadd.f32 %v1130, %v1221
    %v1223 = vpop.f32.mrb[0].mxu0
    %1224 = vdwg.mxu0
    %1225 = vmatprep.subr.mxu0 0.0
    %v1226 = vand.u32 %v1116, 4294901760
    %v1227 = vsub.f32 %v1116, %v1226
    %v1228 = vand.u32 %v1227, 4294901760
    %v1229 = vsub.f32 %v1227, %v1228
    %v1230 = vand.u32 %v1229, 4294901760
    %1231 = vmatpush1.msra.mxu0 %v1230
    %1232 = vmatprep.subr.mxu0 0.0
    %v1233 = vand.u32 %v1117, 4294901760
    %v1234 = vsub.f32 %v1117, %v1233
    %v1235 = vand.u32 %v1234, 4294901760
    %v1236 = vsub.f32 %v1234, %v1235
    %v1237 = vand.u32 %v1236, 4294901760
    %1238 = vmatpush1.msra.mxu0 %v1237
    %1239 = vmatprep.subr.mxu0 0.0
    %1240 = vmatpush1.msra.mxu0 0.0
    %1241 = vmatprep.subr.mxu0 0.0
    %1242 = vmatpush1.msra.mxu0 0.0
    %1243 = vmatprep.subr.mxu0 0.0
    %1244 = vmatpush1.msra.mxu0 0.0
    %1245 = vmatprep.subr.mxu0 0.0
    %1246 = vmatpush1.msra.mxu0 0.0
    %1247 = vmatprep.subr.mxu0 0.0
    %1248 = vmatpush1.msra.mxu0 0.0
    %1249 = vmatprep.subr.mxu0 0.0
    %1250 = vmatpush1.msra.mxu0 0.0
    %1251 = vmatprep.subr.mxu0 0.0
    %1252 = vmatpush1.msra.mxu0 0.0
    %1253 = vmatprep.subr.mxu0 0.0
    %1254 = vmatpush1.msra.mxu0 0.0
    %1255 = vmatprep.subr.mxu0 0.0
    %1256 = vmatpush1.msra.mxu0 0.0
    %1257 = vmatprep.subr.mxu0 0.0
    %1258 = vmatpush1.msra.mxu0 0.0
    %1259 = vmatprep.subr.mxu0 0.0
    %1260 = vmatpush1.msra.mxu0 0.0
    %1261 = vmatprep.subr.mxu0 0.0
    %1262 = vmatpush1.msra.mxu0 0.0
    %1263 = vmatprep.subr.mxu0 0.0
    %1264 = vmatpush1.msra.mxu0 0.0
    %1265 = vmatprep.subr.mxu0 0.0
    %1266 = vmatpush1.msra.mxu0 0.0
    %1267 = vmatprep.subr.mxu0 0.0
    %1268 = vmatpush1.msra.mxu0 0.0
    %1269 = vmatprep.subr.mxu0 0.0
    %1270 = vmatpush1.msra.mxu0 0.0
    %1271 = vmatprep.subr.mxu0 0.0
    %1272 = vmatpush1.msra.mxu0 0.0
    %1273 = vmatprep.subr.mxu0 0.0
    %1274 = vmatpush1.msra.mxu0 0.0
    %1275 = vmatprep.subr.mxu0 0.0
    %1276 = vmatpush1.msra.mxu0 0.0
    %1277 = vmatprep.subr.mxu0 0.0
    %1278 = vmatpush1.msra.mxu0 0.0
    %1279 = vmatprep.subr.mxu0 0.0
    %1280 = vmatpush1.msra.mxu0 0.0
    %1281 = vmatprep.subr.mxu0 0.0
    %1282 = vmatpush1.msra.mxu0 0.0
    %1283 = vmatprep.subr.mxu0 0.0
    %1284 = vmatpush1.msra.mxu0 0.0
    %1285 = vmatprep.subr.mxu0 0.0
    %1286 = vmatpush1.msra.mxu0 0.0
    %1287 = vmatprep.subr.mxu0 0.0
    %1288 = vmatpush1.msra.mxu0 0.0
    %1289 = vmatprep.subr.mxu0 0.0
    %1290 = vmatpush1.msra.mxu0 0.0
    %1291 = vmatprep.subr.mxu0 0.0
    %1292 = vmatpush1.msra.mxu0 0.0
    %1293 = vmatprep.subr.mxu0 0.0
    %1294 = vmatpush1.msra.mxu0 0.0
    %1295 = vmatprep.subr.mxu0 0.0
    %1296 = vmatpush1.msra.mxu0 0.0
    %1297 = vmatprep.subr.mxu0 0.0
    %1298 = vmatpush1.msra.mxu0 0.0
    %1299 = vmatprep.mubr.f32.mxu0 0.0
    %v1300 = vand.u32 %v1133, 4294901760
    %1301 = vmatmul.mubr.f32.gmra.mrb[0].mxu0 %v1300
    %v1302 = vpop.f32.mrb[0].mxu0
    %v1303 = vadd.f32 %v1212, %v1302
    %v1304 = vpop.f32.mrb[0].mxu0
    %1305 = vmatprep.mubr.f32.mxu0 0.0
    %v1306 = vand.u32 %v1136, 4294901760
    %1307 = vmatmul.mubr.f32.gmra.mrb[0].mxu0 %v1306
    %v1308 = vpop.f32.mrb[0].mxu0
    %v1309 = vadd.f32 %v1222, %v1308
    %v1310 = vpop.f32.mrb[0].mxu0
    %1311 = vdwg.mxu0
    %1312 = vmatprep.subr.mxu0 0.0
    %v1313 = vand.u32 %v1116, 4294901760
    %v1314 = vsub.f32 %v1116, %v1313
    %1315 = vmatpush1.msra.mxu0 %v1314
    %1316 = vmatprep.subr.mxu0 0.0
    %v1317 = vand.u32 %v1117, 4294901760
    %v1318 = vsub.f32 %v1117, %v1317
    %1319 = vmatpush1.msra.mxu0 %v1318
    %1320 = vmatprep.subr.mxu0 0.0
    %1321 = vmatpush1.msra.mxu0 0.0
    %1322 = vmatprep.subr.mxu0 0.0
    %1323 = vmatpush1.msra.mxu0 0.0
    %1324 = vmatprep.subr.mxu0 0.0
    %1325 = vmatpush1.msra.mxu0 0.0
    %1326 = vmatprep.subr.mxu0 0.0
    %1327 = vmatpush1.msra.mxu0 0.0
    %1328 = vmatprep.subr.mxu0 0.0
    %1329 = vmatpush1.msra.mxu0 0.0
    %1330 = vmatprep.subr.mxu0 0.0
    %1331 = vmatpush1.msra.mxu0 0.0
    %1332 = vmatprep.subr.mxu0 0.0
    %1333 = vmatpush1.msra.mxu0 0.0
    %1334 = vmatprep.subr.mxu0 0.0
    %1335 = vmatpush1.msra.mxu0 0.0
    %1336 = vmatprep.subr.mxu0 0.0
    %1337 = vmatpush1.msra.mxu0 0.0
    %1338 = vmatprep.subr.mxu0 0.0
    %1339 = vmatpush1.msra.mxu0 0.0
    %1340 = vmatprep.subr.mxu0 0.0
    %1341 = vmatpush1.msra.mxu0 0.0
    %1342 = vmatprep.subr.mxu0 0.0
    %1343 = vmatpush1.msra.mxu0 0.0
    %1344 = vmatprep.subr.mxu0 0.0
    %1345 = vmatpush1.msra.mxu0 0.0
    %1346 = vmatprep.subr.mxu0 0.0
    %1347 = vmatpush1.msra.mxu0 0.0
    %1348 = vmatprep.subr.mxu0 0.0
    %1349 = vmatpush1.msra.mxu0 0.0
    %1350 = vmatprep.subr.mxu0 0.0
    %1351 = vmatpush1.msra.mxu0 0.0
    %1352 = vmatprep.subr.mxu0 0.0
    %1353 = vmatpush1.msra.mxu0 0.0
    %1354 = vmatprep.subr.mxu0 0.0
    %1355 = vmatpush1.msra.mxu0 0.0
    %1356 = vmatprep.subr.mxu0 0.0
    %1357 = vmatpush1.msra.mxu0 0.0
    %1358 = vmatprep.subr.mxu0 0.0
    %1359 = vmatpush1.msra.mxu0 0.0
    %1360 = vmatprep.subr.mxu0 0.0
    %1361 = vmatpush1.msra.mxu0 0.0
    %1362 = vmatprep.subr.mxu0 0.0
    %1363 = vmatpush1.msra.mxu0 0.0
    %1364 = vmatprep.subr.mxu0 0.0
    %1365 = vmatpush1.msra.mxu0 0.0
    %1366 = vmatprep.subr.mxu0 0.0
    %1367 = vmatpush1.msra.mxu0 0.0
    %1368 = vmatprep.subr.mxu0 0.0
    %1369 = vmatpush1.msra.mxu0 0.0
    %1370 = vmatprep.subr.mxu0 0.0
    %1371 = vmatpush1.msra.mxu0 0.0
    %1372 = vmatprep.subr.mxu0 0.0
    %1373 = vmatpush1.msra.mxu0 0.0
    %1374 = vmatprep.subr.mxu0 0.0
    %1375 = vmatpush1.msra.mxu0 0.0
    %1376 = vmatprep.subr.mxu0 0.0
    %1377 = vmatpush1.msra.mxu0 0.0
    %1378 = vmatprep.subr.mxu0 0.0
    %1379 = vmatpush1.msra.mxu0 0.0
    %1380 = vmatprep.mubr.f32.mxu0 0.0
    %v1381 = vand.u32 %v1133, 4294901760
    %v1382 = vsub.f32 %v1133, %v1381
    %1383 = vmatmul.mubr.f32.gmra.mrb[0].mxu0 %v1382
    %v1384 = vpop.f32.mrb[0].mxu0
    %v1385 = vadd.f32 %v1303, %v1384
    %v1386 = vpop.f32.mrb[0].mxu0
    %1387 = vmatprep.mubr.f32.mxu0 0.0
    %v1388 = vand.u32 %v1136, 4294901760
    %v1389 = vsub.f32 %v1136, %v1388
    %1390 = vmatmul.mubr.f32.gmra.mrb[0].mxu0 %v1389
    %v1391 = vpop.f32.mrb[0].mxu0
    %v1392 = vadd.f32 %v1309, %v1391
    %v1393 = vpop.f32.mrb[0].mxu0
    %1394 = vdwg.mxu0
    %1395 = vmatprep.subr.mxu0 0.0
    %v1396 = vand.u32 %v1116, 4294901760
    %1397 = vmatpush1.msra.mxu0 %v1396
    %1398 = vmatprep.subr.mxu0 0.0
    %v1399 = vand.u32 %v1117, 4294901760
    %1400 = vmatpush1.msra.mxu0 %v1399
    %1401 = vmatprep.subr.mxu0 0.0
    %1402 = vmatpush1.msra.mxu0 0.0
    %1403 = vmatprep.subr.mxu0 0.0
    %1404 = vmatpush1.msra.mxu0 0.0
    %1405 = vmatprep.subr.mxu0 0.0
    %1406 = vmatpush1.msra.mxu0 0.0
    %1407 = vmatprep.subr.mxu0 0.0
    %1408 = vmatpush1.msra.mxu0 0.0
    %1409 = vmatprep.subr.mxu0 0.0
    %1410 = vmatpush1.msra.mxu0 0.0
    %1411 = vmatprep.subr.mxu0 0.0
    %1412 = vmatpush1.msra.mxu0 0.0
    %1413 = vmatprep.subr.mxu0 0.0
    %1414 = vmatpush1.msra.mxu0 0.0
    %1415 = vmatprep.subr.mxu0 0.0
    %1416 = vmatpush1.msra.mxu0 0.0
    %1417 = vmatprep.subr.mxu0 0.0
    %1418 = vmatpush1.msra.mxu0 0.0
    %1419 = vmatprep.subr.mxu0 0.0
    %1420 = vmatpush1.msra.mxu0 0.0
    %1421 = vmatprep.subr.mxu0 0.0
    %1422 = vmatpush1.msra.mxu0 0.0
    %1423 = vmatprep.subr.mxu0 0.0
    %1424 = vmatpush1.msra.mxu0 0.0
    %1425 = vmatprep.subr.mxu0 0.0
    %1426 = vmatpush1.msra.mxu0 0.0
    %1427 = vmatprep.subr.mxu0 0.0
    %1428 = vmatpush1.msra.mxu0 0.0
    %1429 = vmatprep.subr.mxu0 0.0
    %1430 = vmatpush1.msra.mxu0 0.0
    %1431 = vmatprep.subr.mxu0 0.0
    %1432 = vmatpush1.msra.mxu0 0.0
    %1433 = vmatprep.subr.mxu0 0.0
    %1434 = vmatpush1.msra.mxu0 0.0
    %1435 = vmatprep.subr.mxu0 0.0
    %1436 = vmatpush1.msra.mxu0 0.0
    %1437 = vmatprep.subr.mxu0 0.0
    %1438 = vmatpush1.msra.mxu0 0.0
    %1439 = vmatprep.subr.mxu0 0.0
    %1440 = vmatpush1.msra.mxu0 0.0
    %1441 = vmatprep.subr.mxu0 0.0
    %1442 = vmatpush1.msra.mxu0 0.0
    %1443 = vmatprep.subr.mxu0 0.0
    %1444 = vmatpush1.msra.mxu0 0.0
    %1445 = vmatprep.subr.mxu0 0.0
    %1446 = vmatpush1.msra.mxu0 0.0
    %1447 = vmatprep.subr.mxu0 0.0
    %1448 = vmatpush1.msra.mxu0 0.0
    %1449 = vmatprep.subr.mxu0 0.0
    %1450 = vmatpush1.msra.mxu0 0.0
    %1451 = vmatprep.subr.mxu0 0.0
    %1452 = vmatpush1.msra.mxu0 0.0
    %1453 = vmatprep.subr.mxu0 0.0
    %1454 = vmatpush1.msra.mxu0 0.0
    %1455 = vmatprep.subr.mxu0 0.0
    %1456 = vmatpush1.msra.mxu0 0.0
    %1457 = vmatprep.subr.mxu0 0.0
    %1458 = vmatpush1.msra.mxu0 0.0
    %1459 = vmatprep.subr.mxu0 0.0
    %1460 = vmatpush1.msra.mxu0 0.0
    %1461 = vmatprep.mubr.f32.mxu0 0.0
    %v1462 = vand.u32 %v1133, 4294901760
    %v1463 = vsub.f32 %v1133, %v1462
    %v1464 = vand.u32 %v1463, 4294901760
    %1465 = vmatmul.mubr.f32.gmra.mrb[0].mxu0 %v1464
    %v1466 = vpop.f32.mrb[0].mxu0
    %v1467 = vadd.f32 %v1385, %v1466
    %v1468 = vpop.f32.mrb[0].mxu0
    %1469 = vmatprep.mubr.f32.mxu0 0.0
    %v1470 = vand.u32 %v1136, 4294901760
    %v1471 = vsub.f32 %v1136, %v1470
    %v1472 = vand.u32 %v1471, 4294901760
    %1473 = vmatmul.mubr.f32.gmra.mrb[0].mxu0 %v1472
    %v1474 = vpop.f32.mrb[0].mxu0
    %v1475 = vadd.f32 %v1392, %v1474
    %v1476 = vpop.f32.mrb[0].mxu0
    %1477 = vdwg.mxu0
    %1478 = vmatprep.subr.mxu0 0.0
    %v1479 = vand.u32 %v1116, 4294901760
    %v1480 = vsub.f32 %v1116, %v1479
    %v1481 = vand.u32 %v1480, 4294901760
    %1482 = vmatpush1.msra.mxu0 %v1481
    %1483 = vmatprep.subr.mxu0 0.0
    %v1484 = vand.u32 %v1117, 4294901760
    %v1485 = vsub.f32 %v1117, %v1484
    %v1486 = vand.u32 %v1485, 4294901760
    %1487 = vmatpush1.msra.mxu0 %v1486
    %1488 = vmatprep.subr.mxu0 0.0
    %1489 = vmatpush1.msra.mxu0 0.0
    %1490 = vmatprep.subr.mxu0 0.0
    %1491 = vmatpush1.msra.mxu0 0.0
    %1492 = vmatprep.subr.mxu0 0.0
    %1493 = vmatpush1.msra.mxu0 0.0
    %1494 = vmatprep.subr.mxu0 0.0
    %1495 = vmatpush1.msra.mxu0 0.0
    %1496 = vmatprep.subr.mxu0 0.0
    %1497 = vmatpush1.msra.mxu0 0.0
    %1498 = vmatprep.subr.mxu0 0.0
    %1499 = vmatpush1.msra.mxu0 0.0
    %1500 = vmatprep.subr.mxu0 0.0
    %1501 = vmatpush1.msra.mxu0 0.0
    %1502 = vmatprep.subr.mxu0 0.0
    %1503 = vmatpush1.msra.mxu0 0.0
    %1504 = vmatprep.subr.mxu0 0.0
    %1505 = vmatpush1.msra.mxu0 0.0
    %1506 = vmatprep.subr.mxu0 0.0
    %1507 = vmatpush1.msra.mxu0 0.0
    %1508 = vmatprep.subr.mxu0 0.0
    %1509 = vmatpush1.msra.mxu0 0.0
    %1510 = vmatprep.subr.mxu0 0.0
    %1511 = vmatpush1.msra.mxu0 0.0
    %1512 = vmatprep.subr.mxu0 0.0
    %1513 = vmatpush1.msra.mxu0 0.0
    %1514 = vmatprep.subr.mxu0 0.0
    %1515 = vmatpush1.msra.mxu0 0.0
    %1516 = vmatprep.subr.mxu0 0.0
    %1517 = vmatpush1.msra.mxu0 0.0
    %1518 = vmatprep.subr.mxu0 0.0
    %1519 = vmatpush1.msra.mxu0 0.0
    %1520 = vmatprep.subr.mxu0 0.0
    %1521 = vmatpush1.msra.mxu0 0.0
    %1522 = vmatprep.subr.mxu0 0.0
    %1523 = vmatpush1.msra.mxu0 0.0
    %1524 = vmatprep.subr.mxu0 0.0
    %1525 = vmatpush1.msra.mxu0 0.0
    %1526 = vmatprep.subr.mxu0 0.0
    %1527 = vmatpush1.msra.mxu0 0.0
    %1528 = vmatprep.subr.mxu0 0.0
    %1529 = vmatpush1.msra.mxu0 0.0
    %1530 = vmatprep.subr.mxu0 0.0
    %1531 = vmatpush1.msra.mxu0 0.0
    %1532 = vmatprep.subr.mxu0 0.0
    %1533 = vmatpush1.msra.mxu0 0.0
    %1534 = vmatprep.subr.mxu0 0.0
    %1535 = vmatpush1.msra.mxu0 0.0
    %1536 = vmatprep.subr.mxu0 0.0
    %1537 = vmatpush1.msra.mxu0 0.0
    %1538 = vmatprep.subr.mxu0 0.0
    %1539 = vmatpush1.msra.mxu0 0.0
    %1540 = vmatprep.subr.mxu0 0.0
    %1541 = vmatpush1.msra.mxu0 0.0
    %1542 = vmatprep.subr.mxu0 0.0
    %1543 = vmatpush1.msra.mxu0 0.0
    %1544 = vmatprep.subr.mxu0 0.0
    %1545 = vmatpush1.msra.mxu0 0.0
    %1546 = vmatprep.subr.mxu0 0.0
    %1547 = vmatpush1.msra.mxu0 0.0
    %1548 = vmatprep.mubr.f32.mxu0 0.0
    %v1549 = vand.u32 %v1133, 4294901760
    %1550 = vmatmul.mubr.f32.gmra.mrb[0].mxu0 %v1549
    %v1551 = vpop.f32.mrb[0].mxu0
    %v1552 = vadd.f32 %v1467, %v1551
    %v1553 = vpop.f32.mrb[0].mxu0
    %1554 = vmatprep.mubr.f32.mxu0 0.0
    %v1555 = vand.u32 %v1136, 4294901760
    %1556 = vmatmul.mubr.f32.gmra.mrb[0].mxu0 %v1555
    %v1557 = vpop.f32.mrb[0].mxu0
    %v1558 = vadd.f32 %v1475, %v1557
    %v1559 = vpop.f32.mrb[0].mxu0
    %1560 = vdwg.mxu0
    %1561 = vmatprep.subr.mxu0 0.0
    %v1562 = vand.u32 %v1116, 4294901760
    %1563 = vmatpush1.msra.mxu0 %v1562
    %1564 = vmatprep.subr.mxu0 0.0
    %v1565 = vand.u32 %v1117, 4294901760
    %1566 = vmatpush1.msra.mxu0 %v1565
    %1567 = vmatprep.subr.mxu0 0.0
    %1568 = vmatpush1.msra.mxu0 0.0
    %1569 = vmatprep.subr.mxu0 0.0
    %1570 = vmatpush1.msra.mxu0 0.0
    %1571 = vmatprep.subr.mxu0 0.0
    %1572 = vmatpush1.msra.mxu0 0.0
    %1573 = vmatprep.subr.mxu0 0.0
    %1574 = vmatpush1.msra.mxu0 0.0
    %1575 = vmatprep.subr.mxu0 0.0
    %1576 = vmatpush1.msra.mxu0 0.0
    %1577 = vmatprep.subr.mxu0 0.0
    %1578 = vmatpush1.msra.mxu0 0.0
    %1579 = vmatprep.subr.mxu0 0.0
    %1580 = vmatpush1.msra.mxu0 0.0
    %1581 = vmatprep.subr.mxu0 0.0
    %1582 = vmatpush1.msra.mxu0 0.0
    %1583 = vmatprep.subr.mxu0 0.0
    %1584 = vmatpush1.msra.mxu0 0.0
    %1585 = vmatprep.subr.mxu0 0.0
    %1586 = vmatpush1.msra.mxu0 0.0
    %1587 = vmatprep.subr.mxu0 0.0
    %1588 = vmatpush1.msra.mxu0 0.0
    %1589 = vmatprep.subr.mxu0 0.0
    %1590 = vmatpush1.msra.mxu0 0.0
    %1591 = vmatprep.subr.mxu0 0.0
    %1592 = vmatpush1.msra.mxu0 0.0
    %1593 = vmatprep.subr.mxu0 0.0
    %1594 = vmatpush1.msra.mxu0 0.0
    %1595 = vmatprep.subr.mxu0 0.0
    %1596 = vmatpush1.msra.mxu0 0.0
    %1597 = vmatprep.subr.mxu0 0.0
    %1598 = vmatpush1.msra.mxu0 0.0
    %1599 = vmatprep.subr.mxu0 0.0
    %1600 = vmatpush1.msra.mxu0 0.0
    %1601 = vmatprep.subr.mxu0 0.0
    %1602 = vmatpush1.msra.mxu0 0.0
    %1603 = vmatprep.subr.mxu0 0.0
    %1604 = vmatpush1.msra.mxu0 0.0
    %1605 = vmatprep.subr.mxu0 0.0
    %1606 = vmatpush1.msra.mxu0 0.0
    %1607 = vmatprep.subr.mxu0 0.0
    %1608 = vmatpush1.msra.mxu0 0.0
    %1609 = vmatprep.subr.mxu0 0.0
    %1610 = vmatpush1.msra.mxu0 0.0
    %1611 = vmatprep.subr.mxu0 0.0
    %1612 = vmatpush1.msra.mxu0 0.0
    %1613 = vmatprep.subr.mxu0 0.0
    %1614 = vmatpush1.msra.mxu0 0.0
    %1615 = vmatprep.subr.mxu0 0.0
    %1616 = vmatpush1.msra.mxu0 0.0
    %1617 = vmatprep.subr.mxu0 0.0
    %1618 = vmatpush1.msra.mxu0 0.0
    %1619 = vmatprep.subr.mxu0 0.0
    %1620 = vmatpush1.msra.mxu0 0.0
    %1621 = vmatprep.subr.mxu0 0.0
    %1622 = vmatpush1.msra.mxu0 0.0
    %1623 = vmatprep.subr.mxu0 0.0
    %1624 = vmatpush1.msra.mxu0 0.0
    %1625 = vmatprep.subr.mxu0 0.0
    %1626 = vmatpush1.msra.mxu0 0.0
    %1627 = vmatprep.mubr.f32.mxu0 0.0
    %v1628 = vand.u32 %v1133, 4294901760
    %1629 = vmatmul.mubr.f32.gmra.mrb[0].mxu0 %v1628
    %v1630 = vpop.f32.mrb[0].mxu0
    %v1631 = vadd.f32 %v1552, %v1630
    %v1632 = vpop.f32.mrb[0].mxu0
    %1633 = vmatprep.mubr.f32.mxu0 0.0
    %v1634 = vand.u32 %v1136, 4294901760
    %1635 = vmatmul.mubr.f32.gmra.mrb[0].mxu0 %v1634
    %v1636 = vpop.f32.mrb[0].mxu0
    %v1637 = vadd.f32 %v1558, %v1636
    %v1638 = vpop.f32.mrb[0].mxu0
    %1639 = vdwg.mxu0
    %vm1640 = vcmask 15360
    %1641 = vst.msk [vmem:[#allocation14] sm:$0xff] %vm1640, %v1631
    %1642 = vst.msk [vmem:[#allocation14 + $0x8] sm:$0xff] %vm1640, %v1637
    // Predicated region
    $region58: #{_lambda_.1} parent=1 // pred_check
      _
    $region59: #{_lambda_.1} parent=1 // pred_check_branch
      %1644 = sbr.rel (0) target = $region61
    $region60: #{_lambda_.1} parent=1 // pred_region
      %s1646 = ssub.s32 256, 256
      %1647 = vsyncadd [#allocation4], %s1646
      %s1648 = sshll.u32 [#allocation14], 4
      %s1649 = int_to_ptr.vmem [resolvable:$true] %s1648
      %1654 = dma.vmem_to_hbm [thread:$0]  %s1649, 256, %s7, [#allocation4], 128, 128, 8
    $region61: #{_lambda_.1} parent=1 // pred_fallthru
      _
    // Predicated region
    $region62: #{_lambda_.1} parent=1 // pred_check
      _
    $region63: #{_lambda_.1} parent=1 // pred_check_branch
      %1656 = sbr.rel (0) target = $region65
    $region64: #{_lambda_.1} parent=1 // pred_region
      %1657 = dma.done [#allocation4], 256
    $region65: #{_lambda_.1} parent=1 // pred_fallthru
      _
    %1658 = vsyncpa [#allocation3], 1
    %1659 = vsyncpa [#allocation6], 1
    %1660 = vsyncpa [#allocation9], 1
    %1661 = vsyncpa [#allocation12], 1
    %1662 = vsyncpa [#allocation4], 1

</llo_original>
